<compile_context>
chip_gen: v7x
topology: tpu7x:2x2x1
jax: 0.10.0
libtpu: 0.0.40
codegen_flags: <defaults>
</compile_context>

<pallas_src>
import functools

import jax
import jax.numpy as jnp
from jax.experimental import pallas as pl
from jax.experimental.pallas import tpu as pltpu

EPS = 1e-5
MXU_DTYPE = jnp.bfloat16            # MXU operand / intermediate storage dtype
VMEM_LIMIT = 32 * 1024 * 1024       # safe on v5e/v6e/v7x for these block sizes


def _largest_divisor_at_most(n, cap):
    d = max(1, min(n, cap))
    while n % d:
        d -= 1
    return d


def _conv3x3_stats_kernel(*refs, width, apply_act):
    """(optional fused BN+ReLU) -> 3x3/pad1 conv -> per-channel sum / sumsq.

    refs (apply_act=True) : x, scale, shift, w, y, stats
    refs (apply_act=False): x, w, y, stats
      x     : (B, Cin, L)   input block, L = H*W flattened (W minor)
      scale : (Cin, 1) f32 \  folded BN scale/shift applied to x (then ReLU)
      shift : (Cin, 1) f32 /  before the conv, iff apply_act
      w     : (Cout, 9*Cin) bf16 weights, row order (ky, kx, ci)
      y     : (B, Cout, L)  bf16 pre-BN conv output
      stats : (1, Cout, 2)  f32, [:, 0] = sum, [:, 1] = sum of squares over B*L
    """
    if apply_act:
        x_ref, scale_ref, shift_ref, w_ref, y_ref, stats_ref = refs
    else:
        x_ref, w_ref, y_ref, stats_ref = refs
        scale_ref = shift_ref = None

    bsz, cin, L = x_ref.shape
    pad = width + 1

    xin = x_ref[...].astype(jnp.float32)                    # (B, Cin, L)
    if apply_act:
        # (Cin, 1) broadcasts against (B, Cin, L).
        xin = jnp.maximum(xin * scale_ref[...] + shift_ref[...], 0.0)
    a = xin.astype(MXU_DTYPE)

    # Horizontal tap validity, built in-kernel (kills row wraparound of the
    # flat-padded layout).  dx = -1 needs x >= 1, dx = +1 needs x <= W-2.
    col = jax.lax.broadcasted_iota(jnp.int32, (1, L), 1) % width
    valid_l = col >= 1
    valid_r = col <= width - 2

    # im2col: per image, 9 statically shifted windows of a flat zero-padded
    # row -> (9*Cin, L); vertical taps (dy = +-1) land on correct pixels or
    # inside the zero halo.  Images concatenate along lanes -> one long dot.
    zpad = jnp.zeros((cin, pad), MXU_DTYPE)
    cols = []
    for b in range(bsz):
        a_flat = jnp.concatenate([zpad, a[b], zpad], axis=1)  # (Cin, L + 2*pad)
        windows = []
        for k in range(9):
            dy, dx = k // 3 - 1, k % 3 - 1
            off = pad + dy * width + dx                        # static offset
            win = a_flat[:, off:off + L]                       # (Cin, L)
            if dx == -1:
                win = jnp.where(valid_l, win, 0)
            elif dx == 1:
                win = jnp.where(valid_r, win, 0)
            windows.append(win)
        cols.append(jnp.concatenate(windows, axis=0))          # (9*Cin, L)
    patches = jnp.concatenate(cols, axis=1)                    # (9*Cin, B*L)

    y = jnp.dot(w_ref[...], patches,
                preferred_element_type=jnp.float32)            # (Cout, B*L) f32

    for b in range(bsz):                                       # static lane slices
        y_ref[b] = y[:, b * L:(b + 1) * L].astype(MXU_DTYPE)

    s = jnp.sum(y, axis=1, keepdims=True)                      # (Cout, 1)
    q = jnp.sum(y * y, axis=1, keepdims=True)                  # (Cout, 1)
    stats_ref[0] = jnp.concatenate([s, q], axis=1)             # (Cout, 2)


def _conv3x3_stats_call(x, wt, *, width, scale=None, shift=None):
    n, cin, L = x.shape
    cout = wt.shape[0]
    apply_act = scale is not None

    # Largest batch block (capped at 8 images to bound unrolling) whose
    # working set stays well inside VMEM once the pipeline double-buffers it.
    per_img = L * (6 * cin + 18 * cin + 6 * cout)     # rough bytes / image
    cap = max(1, (4 * 1024 * 1024) // max(per_img, 1))
    block_n = _largest_divisor_at_most(n, min(cap, 8))
    n_blocks = n // block_n

    whole2 = lambda i: (0, 0)
    in_specs = [pl.BlockSpec((block_n, cin, L), lambda i: (i, 0, 0))]
    args = [x]
    if apply_act:
        in_specs += [pl.BlockSpec((cin, 1), whole2),
                     pl.BlockSpec((cin, 1), whole2)]
        args += [scale, shift]
    in_specs.append(pl.BlockSpec((cout, 9 * cin), whole2))
    args.append(wt)

    kernel = functools.partial(_conv3x3_stats_kernel, width=width,
                               apply_act=apply_act)
    return pl.pallas_call(
        kernel,
        grid=(n_blocks,),
        in_specs=in_specs,
        out_specs=(
            pl.BlockSpec((block_n, cout, L), lambda i: (i, 0, 0)),
            pl.BlockSpec((1, cout, 2), lambda i: (i, 0, 0)),
        ),
        out_shape=(
            jax.ShapeDtypeStruct((n, cout, L), MXU_DTYPE),
            jax.ShapeDtypeStruct((n_blocks, cout, 2), jnp.float32),
        ),
        compiler_params=pltpu.CompilerParams(
            dimension_semantics=("parallel",),
            vmem_limit_bytes=VMEM_LIMIT),
    )(*args)


def _bn_residual_relu_kernel(y_ref, x_ref, scale_ref, shift_ref, out_ref):
    """out = relu(scale * y + shift + x); f32 math, lane-dense."""
    out_ref[...] = jnp.maximum(
        y_ref[...].astype(jnp.float32) * scale_ref[...] + shift_ref[...]
        + x_ref[...], 0.0)


def _fold_bn(stats, count, gamma, beta):
    """Per-channel (scale, shift) with scale*x + shift == BN_train(x)."""
    c = gamma.shape[0]
    total = jnp.sum(stats, axis=0)                       # (C, 2)
    mean = total[:, 0:1] / count
    var = jnp.maximum(total[:, 1:2] / count - mean * mean, 0.0)  # biased var
    scale = gamma.reshape(c, 1) * jax.lax.rsqrt(var + EPS)
    shift = beta.reshape(c, 1) - mean * scale
    return scale, shift


def basic_block_forward(x_nchw, w1, g1, b1, w2, g2, b2):
    """x_nchw: (N, C, H, W); w*: (Cout, Cin, 3, 3) like nn.Conv2d.weight."""
    n, c, h, w = x_nchw.shape
    cout = w1.shape[0]
    assert c == cout, "stride=1 / downsample=None BasicBlock needs Cin == Cout"
    L = h * w

    # channel-first flat layout: free reshape from NCHW, spatial on lanes.
    x_cf = x_nchw.reshape(n, c, L).astype(jnp.float32)

    # conv weights (Cout, Cin, 3, 3) -> (Cout, 9*Cin), row order (ky, kx, ci).
    w1t = jnp.transpose(w1, (0, 2, 3, 1)).reshape(cout, 9 * c).astype(MXU_DTYPE)
    w2t = jnp.transpose(w2, (0, 2, 3, 1)).reshape(cout, 9 * cout).astype(MXU_DTYPE)

    count = jnp.float32(n * L)

    # ---- conv1 (+ per-channel sum / sumsq for BN1 batch stats) ----
    y1, st1 = _conv3x3_stats_call(x_cf, w1t, width=w)
    scale1, shift1 = _fold_bn(st1, count, g1, b1)

    # ---- fused bn1 + relu -> conv2 (+ stats for BN2) ----
    y2, st2 = _conv3x3_stats_call(y1, w2t, width=w, scale=scale1, shift=shift1)
    scale2, shift2 = _fold_bn(st2, count, g2, b2)

    # ---- bn2 + residual add + relu on a flat (N*C, L) view ----
    R = n * c
    rb = R if R <= 1024 else _largest_divisor_at_most(R, 1024)
    y2f = y2.reshape(R, L)
    xf = x_cf.reshape(R, L)
    scale2r = jnp.tile(scale2, (n, 1))                   # (R, 1) per-row
    shift2r = jnp.tile(shift2, (n, 1))

    out = pl.pallas_call(
        _bn_residual_relu_kernel,
        grid=(R // rb,),
        in_specs=[
            pl.BlockSpec((rb, L), lambda i: (i, 0)),
            pl.BlockSpec((rb, L), lambda i: (i, 0)),
            pl.BlockSpec((rb, 1), lambda i: (i, 0)),
            pl.BlockSpec((rb, 1), lambda i: (i, 0)),
        ],
        out_specs=pl.BlockSpec((rb, L), lambda i: (i, 0)),
        out_shape=jax.ShapeDtypeStruct((R, L), jnp.float32),
        compiler_params=pltpu.CompilerParams(
            dimension_semantics=("parallel",),
            vmem_limit_bytes=VMEM_LIMIT),
    )(y2f, xf, scale2r, shift2r)

    return out.reshape(n, c, h, w)


def reference_forward(x, w1, g1, b1, w2, g2, b2):
    """Pure-JAX f32 reference mirroring the PyTorch forward (training-mode BN)."""
    def conv(h_, w_):
        return jax.lax.conv_general_dilated(
            h_, w_, (1, 1), ((1, 1), (1, 1)),
            dimension_numbers=("NCHW", "OIHW", "NCHW"))

    def bn(h_, g, b):
        m = h_.mean(axis=(0, 2, 3), keepdims=True)
        v = ((h_ - m) ** 2).mean(axis=(0, 2, 3), keepdims=True)
        return (h_ - m) * jax.lax.rsqrt(v + EPS) * g.reshape(1, -1, 1, 1) \
            + b.reshape(1, -1, 1, 1)

    out = jax.nn.relu(bn(conv(x, w1), g1, b1))
    out = bn(conv(out, w2), g2, b2)
    return jax.nn.relu(out + x)


if __name__ == "__main__":
    # Small deterministic config: inplanes = planes = 4, 16x16 spatial, batch 2.
    N, C, H, W = 2, 4, 16, 16
    key = jax.random.PRNGKey(0)
    kx, kw1, kw2 = jax.random.split(key, 3)

    x = jax.random.normal(kx, (N, C, H, W), dtype=jnp.float32)
    w1 = 0.1 * jax.random.normal(kw1, (C, C, 3, 3), dtype=jnp.float32)
    w2 = 0.1 * jax.random.normal(kw2, (C, C, 3, 3), dtype=jnp.float32)
    # BatchNorm2d default init: weight = 1, bias = 0.
    g1 = jnp.ones((C,), jnp.float32)
    b1 = jnp.zeros((C,), jnp.float32)
    g2 = jnp.ones((C,), jnp.float32)
    b2 = jnp.zeros((C,), jnp.float32)

    fwd = jax.jit(basic_block_forward)
    out = jax.block_until_ready(fwd(x, w1, g1, b1, w2, g2, b2))

    ref = reference_forward(x, w1, g1, b1, w2, g2, b2)
    assert out.shape == (N, C, H, W)
    # bf16 MXU operands / bf16 intermediate storage (f32 accumulation & stats)
    # -> loosened tolerance vs the f32 reference.
    err = jnp.max(jnp.abs(out - ref))
    assert jnp.allclose(out, ref, atol=1e-1, rtol=1e-1), f"max abs err {err}"

    print("KERNEL_OK")
</pallas_src>

<mosaic_0001>
module attributes {stable_mosaic.version = 11 : i64} {
  func.func @_conv3x3_stats_kernel(%arg0: i32, %arg1: memref<2x4x256xf32, #tpu.memory_space<vmem>>, %arg2: memref<4x36xbf16, #tpu.memory_space<vmem>>, %arg3: memref<2x4x256xbf16, #tpu.memory_space<vmem>>, %arg4: memref<1x4x2xf32, #tpu.memory_space<vmem>>) attributes {dimension_semantics = [#tpu.dimension_semantics<parallel>], iteration_bounds = array<i64: 1>, scalar_prefetch = 0 : i64, scratch_operands = 0 : i64, tpu.core_type = #tpu.core_type<tc>, window_params = [{transform_indices = @transform_0, window_bounds = array<i64: 2, 4, 256>}, {pipeline_mode = #tpu.pipeline_mode<synchronous>, transform_indices = @transform_1, window_bounds = array<i64: 4, 36>}, {transform_indices = @transform_2, window_bounds = array<i64: 2, 4, 256>}, {transform_indices = @transform_3, window_bounds = array<i64: 1, 4, 2>}]} {
    %c0 = arith.constant 0 : index
    %c0_0 = arith.constant 0 : index
    %c0_1 = arith.constant 0 : index
    %0 = vector.load %arg1[%c0, %c0_0, %c0_1] : memref<2x4x256xf32, #tpu.memory_space<vmem>>, vector<2x4x256xf32>
    %1 = arith.truncf %0 : vector<2x4x256xf32> to vector<2x4x256xbf16>
    %2 = tpu.iota {dimensions = array<i32: 1>} : vector<1x256xi32>
    %c16_i32 = arith.constant 16 : i32
    %c0_i32 = arith.constant 0 : i32
    %3 = arith.cmpi eq, %c16_i32, %c0_i32 : i32
    %c1_i32 = arith.constant 1 : i32
    %4 = arith.select %3, %c1_i32, %c16_i32 : i32
    %5 = vector.broadcast %4 : i32 to vector<1x256xi32>
    %6 = arith.remsi %2, %5 : vector<1x256xi32>
    %c0_i32_2 = arith.constant 0 : i32
    %7 = vector.broadcast %c0_i32_2 : i32 to vector<1x256xi32>
    %8 = arith.cmpi ne, %6, %7 : vector<1x256xi32>
    %c0_i32_3 = arith.constant 0 : i32
    %9 = vector.broadcast %c0_i32_3 : i32 to vector<1x256xi32>
    %10 = arith.cmpi slt, %6, %9 : vector<1x256xi32>
    %c0_i32_4 = arith.constant 0 : i32
    %11 = arith.cmpi slt, %4, %c0_i32_4 : i32
    %12 = vector.broadcast %11 : i1 to vector<1x256xi1>
    %13 = vector.broadcast %12 : vector<1x256xi1> to vector<1x256xi1>
    %14 = arith.xori %10, %13 : vector<1x256xi1>
    %15 = arith.andi %14, %8 : vector<1x256xi1>
    %16 = vector.broadcast %4 : i32 to vector<1x256xi32>
    %17 = arith.addi %6, %16 : vector<1x256xi32>
    %18 = arith.select %15, %17, %6 : vector<1x256xi1>, vector<1x256xi32>
    %c1_i32_5 = arith.constant 1 : i32
    %19 = vector.broadcast %c1_i32_5 : i32 to vector<1x256xi32>
    %20 = arith.cmpi sge, %18, %19 : vector<1x256xi32>
    %c14_i32 = arith.constant 14 : i32
    %21 = vector.broadcast %c14_i32 : i32 to vector<1x256xi32>
    %22 = arith.cmpi sle, %18, %21 : vector<1x256xi32>
    %cst = arith.constant 0.000000e+00 : bf16
    %23 = vector.broadcast %cst : bf16 to vector<4x17xbf16>
    %24 = vector.extract_strided_slice %1 {offsets = [0, 0, 0], sizes = [1, 4, 256], strides = [1, 1, 1]} : vector<2x4x256xbf16> to vector<1x4x256xbf16>
    %25 = vector.shape_cast %24 : vector<1x4x256xbf16> to vector<4x256xbf16>
    %26 = tpu.concatenate %23, %25, %23 in 1 : vector<4x17xbf16>, vector<4x256xbf16>, vector<4x17xbf16> -> vector<4x290xbf16>
    %27 = vector.extract_strided_slice %26 {offsets = [0, 0], sizes = [4, 256], strides = [1, 1]} : vector<4x290xbf16> to vector<4x256xbf16>
    %c0_i32_6 = arith.constant 0 : i32
    %28 = arith.sitofp %c0_i32_6 : i32 to bf16
    %29 = vector.shape_cast %20 : vector<1x256xi1> to vector<1x256xi1>
    %30 = vector.broadcast %29 : vector<1x256xi1> to vector<4x256xi1>
    %31 = vector.broadcast %28 : bf16 to vector<4x256xbf16>
    %32 = arith.select %30, %27, %31 : vector<4x256xi1>, vector<4x256xbf16>
    %33 = vector.extract_strided_slice %26 {offsets = [0, 1], sizes = [4, 256], strides = [1, 1]} : vector<4x290xbf16> to vector<4x256xbf16>
    %34 = vector.extract_strided_slice %26 {offsets = [0, 2], sizes = [4, 256], strides = [1, 1]} : vector<4x290xbf16> to vector<4x256xbf16>
    %c0_i32_7 = arith.constant 0 : i32
    %35 = arith.sitofp %c0_i32_7 : i32 to bf16
    %36 = vector.shape_cast %22 : vector<1x256xi1> to vector<1x256xi1>
    %37 = vector.broadcast %36 : vector<1x256xi1> to vector<4x256xi1>
    %38 = vector.broadcast %35 : bf16 to vector<4x256xbf16>
    %39 = arith.select %37, %34, %38 : vector<4x256xi1>, vector<4x256xbf16>
    %40 = vector.extract_strided_slice %26 {offsets = [0, 16], sizes = [4, 256], strides = [1, 1]} : vector<4x290xbf16> to vector<4x256xbf16>
    %c0_i32_8 = arith.constant 0 : i32
    %41 = arith.sitofp %c0_i32_8 : i32 to bf16
    %42 = vector.shape_cast %20 : vector<1x256xi1> to vector<1x256xi1>
    %43 = vector.broadcast %42 : vector<1x256xi1> to vector<4x256xi1>
    %44 = vector.broadcast %41 : bf16 to vector<4x256xbf16>
    %45 = arith.select %43, %40, %44 : vector<4x256xi1>, vector<4x256xbf16>
    %46 = vector.extract_strided_slice %26 {offsets = [0, 17], sizes = [4, 256], strides = [1, 1]} : vector<4x290xbf16> to vector<4x256xbf16>
    %47 = vector.extract_strided_slice %26 {offsets = [0, 18], sizes = [4, 256], strides = [1, 1]} : vector<4x290xbf16> to vector<4x256xbf16>
    %c0_i32_9 = arith.constant 0 : i32
    %48 = arith.sitofp %c0_i32_9 : i32 to bf16
    %49 = vector.shape_cast %22 : vector<1x256xi1> to vector<1x256xi1>
    %50 = vector.broadcast %49 : vector<1x256xi1> to vector<4x256xi1>
    %51 = vector.broadcast %48 : bf16 to vector<4x256xbf16>
    %52 = arith.select %50, %47, %51 : vector<4x256xi1>, vector<4x256xbf16>
    %53 = vector.extract_strided_slice %26 {offsets = [0, 32], sizes = [4, 256], strides = [1, 1]} : vector<4x290xbf16> to vector<4x256xbf16>
    %c0_i32_10 = arith.constant 0 : i32
    %54 = arith.sitofp %c0_i32_10 : i32 to bf16
    %55 = vector.shape_cast %20 : vector<1x256xi1> to vector<1x256xi1>
    %56 = vector.broadcast %55 : vector<1x256xi1> to vector<4x256xi1>
    %57 = vector.broadcast %54 : bf16 to vector<4x256xbf16>
    %58 = arith.select %56, %53, %57 : vector<4x256xi1>, vector<4x256xbf16>
    %59 = vector.extract_strided_slice %26 {offsets = [0, 33], sizes = [4, 256], strides = [1, 1]} : vector<4x290xbf16> to vector<4x256xbf16>
    %60 = vector.extract_strided_slice %26 {offsets = [0, 34], sizes = [4, 256], strides = [1, 1]} : vector<4x290xbf16> to vector<4x256xbf16>
    %c0_i32_11 = arith.constant 0 : i32
    %61 = arith.sitofp %c0_i32_11 : i32 to bf16
    %62 = vector.shape_cast %22 : vector<1x256xi1> to vector<1x256xi1>
    %63 = vector.broadcast %62 : vector<1x256xi1> to vector<4x256xi1>
    %64 = vector.broadcast %61 : bf16 to vector<4x256xbf16>
    %65 = arith.select %63, %60, %64 : vector<4x256xi1>, vector<4x256xbf16>
    %66 = tpu.concatenate %32, %33, %39, %45, %46, %52, %58, %59, %65 in 0 : vector<4x256xbf16>, vector<4x256xbf16>, vector<4x256xbf16>, vector<4x256xbf16>, vector<4x256xbf16>, vector<4x256xbf16>, vector<4x256xbf16>, vector<4x256xbf16>, vector<4x256xbf16> -> vector<36x256xbf16>
    %67 = vector.extract_strided_slice %1 {offsets = [1, 0, 0], sizes = [1, 4, 256], strides = [1, 1, 1]} : vector<2x4x256xbf16> to vector<1x4x256xbf16>
    %68 = vector.shape_cast %67 : vector<1x4x256xbf16> to vector<4x256xbf16>
    %69 = tpu.concatenate %23, %68, %23 in 1 : vector<4x17xbf16>, vector<4x256xbf16>, vector<4x17xbf16> -> vector<4x290xbf16>
    %70 = vector.extract_strided_slice %69 {offsets = [0, 0], sizes = [4, 256], strides = [1, 1]} : vector<4x290xbf16> to vector<4x256xbf16>
    %c0_i32_12 = arith.constant 0 : i32
    %71 = arith.sitofp %c0_i32_12 : i32 to bf16
    %72 = vector.shape_cast %20 : vector<1x256xi1> to vector<1x256xi1>
    %73 = vector.broadcast %72 : vector<1x256xi1> to vector<4x256xi1>
    %74 = vector.broadcast %71 : bf16 to vector<4x256xbf16>
    %75 = arith.select %73, %70, %74 : vector<4x256xi1>, vector<4x256xbf16>
    %76 = vector.extract_strided_slice %69 {offsets = [0, 1], sizes = [4, 256], strides = [1, 1]} : vector<4x290xbf16> to vector<4x256xbf16>
    %77 = vector.extract_strided_slice %69 {offsets = [0, 2], sizes = [4, 256], strides = [1, 1]} : vector<4x290xbf16> to vector<4x256xbf16>
    %c0_i32_13 = arith.constant 0 : i32
    %78 = arith.sitofp %c0_i32_13 : i32 to bf16
    %79 = vector.shape_cast %22 : vector<1x256xi1> to vector<1x256xi1>
    %80 = vector.broadcast %79 : vector<1x256xi1> to vector<4x256xi1>
    %81 = vector.broadcast %78 : bf16 to vector<4x256xbf16>
    %82 = arith.select %80, %77, %81 : vector<4x256xi1>, vector<4x256xbf16>
    %83 = vector.extract_strided_slice %69 {offsets = [0, 16], sizes = [4, 256], strides = [1, 1]} : vector<4x290xbf16> to vector<4x256xbf16>
    %c0_i32_14 = arith.constant 0 : i32
    %84 = arith.sitofp %c0_i32_14 : i32 to bf16
    %85 = vector.shape_cast %20 : vector<1x256xi1> to vector<1x256xi1>
    %86 = vector.broadcast %85 : vector<1x256xi1> to vector<4x256xi1>
    %87 = vector.broadcast %84 : bf16 to vector<4x256xbf16>
    %88 = arith.select %86, %83, %87 : vector<4x256xi1>, vector<4x256xbf16>
    %89 = vector.extract_strided_slice %69 {offsets = [0, 17], sizes = [4, 256], strides = [1, 1]} : vector<4x290xbf16> to vector<4x256xbf16>
    %90 = vector.extract_strided_slice %69 {offsets = [0, 18], sizes = [4, 256], strides = [1, 1]} : vector<4x290xbf16> to vector<4x256xbf16>
    %c0_i32_15 = arith.constant 0 : i32
    %91 = arith.sitofp %c0_i32_15 : i32 to bf16
    %92 = vector.shape_cast %22 : vector<1x256xi1> to vector<1x256xi1>
    %93 = vector.broadcast %92 : vector<1x256xi1> to vector<4x256xi1>
    %94 = vector.broadcast %91 : bf16 to vector<4x256xbf16>
    %95 = arith.select %93, %90, %94 : vector<4x256xi1>, vector<4x256xbf16>
    %96 = vector.extract_strided_slice %69 {offsets = [0, 32], sizes = [4, 256], strides = [1, 1]} : vector<4x290xbf16> to vector<4x256xbf16>
    %c0_i32_16 = arith.constant 0 : i32
    %97 = arith.sitofp %c0_i32_16 : i32 to bf16
    %98 = vector.shape_cast %20 : vector<1x256xi1> to vector<1x256xi1>
    %99 = vector.broadcast %98 : vector<1x256xi1> to vector<4x256xi1>
    %100 = vector.broadcast %97 : bf16 to vector<4x256xbf16>
    %101 = arith.select %99, %96, %100 : vector<4x256xi1>, vector<4x256xbf16>
    %102 = vector.extract_strided_slice %69 {offsets = [0, 33], sizes = [4, 256], strides = [1, 1]} : vector<4x290xbf16> to vector<4x256xbf16>
    %103 = vector.extract_strided_slice %69 {offsets = [0, 34], sizes = [4, 256], strides = [1, 1]} : vector<4x290xbf16> to vector<4x256xbf16>
    %c0_i32_17 = arith.constant 0 : i32
    %104 = arith.sitofp %c0_i32_17 : i32 to bf16
    %105 = vector.shape_cast %22 : vector<1x256xi1> to vector<1x256xi1>
    %106 = vector.broadcast %105 : vector<1x256xi1> to vector<4x256xi1>
    %107 = vector.broadcast %104 : bf16 to vector<4x256xbf16>
    %108 = arith.select %106, %103, %107 : vector<4x256xi1>, vector<4x256xbf16>
    %109 = tpu.concatenate %75, %76, %82, %88, %89, %95, %101, %102, %108 in 0 : vector<4x256xbf16>, vector<4x256xbf16>, vector<4x256xbf16>, vector<4x256xbf16>, vector<4x256xbf16>, vector<4x256xbf16>, vector<4x256xbf16>, vector<4x256xbf16>, vector<4x256xbf16> -> vector<36x256xbf16>
    %110 = tpu.concatenate %66, %109 in 1 : vector<36x256xbf16>, vector<36x256xbf16> -> vector<36x512xbf16>
    %c0_18 = arith.constant 0 : index
    %c0_19 = arith.constant 0 : index
    %111 = vector.load %arg2[%c0_18, %c0_19] : memref<4x36xbf16, #tpu.memory_space<vmem>>, vector<4x36xbf16>
    %cst_20 = arith.constant dense<0.000000e+00> : vector<4x512xf32>
    %112 = tpu.matmul %111, %110, %cst_20 {dimension_numbers = #tpu.dot_dimension_numbers<[1], [0], [0], [1], [0, 0, 1, 1], [], []>} : vector<4x36xbf16>, vector<36x512xbf16>, vector<4x512xf32> -> vector<4x512xf32>
    %113 = vector.extract_strided_slice %112 {offsets = [0, 0], sizes = [4, 256], strides = [1, 1]} : vector<4x512xf32> to vector<4x256xf32>
    %114 = arith.truncf %113 : vector<4x256xf32> to vector<4x256xbf16>
    %c0_21 = arith.constant 0 : index
    %c0_22 = arith.constant 0 : index
    %c0_23 = arith.constant 0 : index
    %115 = vector.load %arg3[%c0_21, %c0_22, %c0_23] : memref<2x4x256xbf16, #tpu.memory_space<vmem>>, vector<1x4x256xbf16>
    %116 = vector.shape_cast %115 : vector<1x4x256xbf16> to vector<4x256xbf16>
    %117 = vector.shape_cast %114 : vector<4x256xbf16> to vector<1x4x256xbf16>
    tpu.vector_store %arg3[%c0_21, %c0_22, %c0_23], %117 {strides = array<i32>} : memref<2x4x256xbf16, #tpu.memory_space<vmem>>, vector<1x4x256xbf16>,
    %118 = vector.extract_strided_slice %112 {offsets = [0, 256], sizes = [4, 256], strides = [1, 1]} : vector<4x512xf32> to vector<4x256xf32>
    %119 = arith.truncf %118 : vector<4x256xf32> to vector<4x256xbf16>
    %c1 = arith.constant 1 : index
    %c0_24 = arith.constant 0 : index
    %c0_25 = arith.constant 0 : index
    %120 = vector.load %arg3[%c1, %c0_24, %c0_25] : memref<2x4x256xbf16, #tpu.memory_space<vmem>>, vector<1x4x256xbf16>
    %121 = vector.shape_cast %120 : vector<1x4x256xbf16> to vector<4x256xbf16>
    %122 = vector.shape_cast %119 : vector<4x256xbf16> to vector<1x4x256xbf16>
    tpu.vector_store %arg3[%c1, %c0_24, %c0_25], %122 {strides = array<i32>} : memref<2x4x256xbf16, #tpu.memory_space<vmem>>, vector<1x4x256xbf16>,
    %cst_26 = arith.constant dense<0.000000e+00> : vector<4xf32>
    %123 = vector.multi_reduction <add>, %112, %cst_26 [1] : vector<4x512xf32> to vector<4xf32>
    %124 = vector.shape_cast %123 : vector<4xf32> to vector<4x1xf32>
    %125 = arith.mulf %112, %112 : vector<4x512xf32>
    %cst_27 = arith.constant dense<0.000000e+00> : vector<4xf32>
    %126 = vector.multi_reduction <add>, %125, %cst_27 [1] : vector<4x512xf32> to vector<4xf32>
    %127 = vector.shape_cast %126 : vector<4xf32> to vector<4x1xf32>
    %128 = tpu.concatenate %124, %127 in 1 : vector<4x1xf32>, vector<4x1xf32> -> vector<4x2xf32>
    %c0_28 = arith.constant 0 : index
    %c0_29 = arith.constant 0 : index
    %c0_30 = arith.constant 0 : index
    %129 = vector.load %arg4[%c0_28, %c0_29, %c0_30] : memref<1x4x2xf32, #tpu.memory_space<vmem>>, vector<1x4x2xf32>
    %130 = vector.shape_cast %129 : vector<1x4x2xf32> to vector<4x2xf32>
    %131 = vector.shape_cast %128 : vector<4x2xf32> to vector<1x4x2xf32>
    tpu.vector_store %arg4[%c0_28, %c0_29, %c0_30], %131 {strides = array<i32>} : memref<1x4x2xf32, #tpu.memory_space<vmem>>, vector<1x4x2xf32>,
    return
  }
  func.func @transform_0(%arg0: i32) -> (i32, i32, i32) {
    %c0_i32 = arith.constant 0 : i32
    %c0_i32_0 = arith.constant 0 : i32
    %c0_i32_1 = arith.constant 0 : i32
    return %arg0, %c0_i32, %c0_i32_0 : i32, i32, i32
  }
  func.func @transform_1(%arg0: i32) -> (i32, i32) {
    %c0_i32 = arith.constant 0 : i32
    %c0_i32_0 = arith.constant 0 : i32
    %c0_i32_1 = arith.constant 0 : i32
    return %c0_i32, %c0_i32_0 : i32, i32
  }
  func.func @transform_2(%arg0: i32) -> (i32, i32, i32) {
    %c0_i32 = arith.constant 0 : i32
    %c0_i32_0 = arith.constant 0 : i32
    %c0_i32_1 = arith.constant 0 : i32
    return %arg0, %c0_i32, %c0_i32_0 : i32, i32, i32
  }
  func.func @transform_3(%arg0: i32) -> (i32, i32, i32) {
    %c0_i32 = arith.constant 0 : i32
    %c0_i32_0 = arith.constant 0 : i32
    %c0_i32_1 = arith.constant 0 : i32
    return %arg0, %c0_i32, %c0_i32_0 : i32, i32, i32
  }
}

module attributes {stable_mosaic.version = 11 : i64} {
  func.func @_conv3x3_stats_kernel(%arg0: i32, %arg1: memref<2x4x256xbf16, #tpu.memory_space<vmem>>, %arg2: memref<4x1xf32, #tpu.memory_space<vmem>>, %arg3: memref<4x1xf32, #tpu.memory_space<vmem>>, %arg4: memref<4x36xbf16, #tpu.memory_space<vmem>>, %arg5: memref<2x4x256xbf16, #tpu.memory_space<vmem>>, %arg6: memref<1x4x2xf32, #tpu.memory_space<vmem>>) attributes {dimension_semantics = [#tpu.dimension_semantics<parallel>], iteration_bounds = array<i64: 1>, scalar_prefetch = 0 : i64, scratch_operands = 0 : i64, tpu.core_type = #tpu.core_type<tc>, window_params = [{transform_indices = @transform_0, window_bounds = array<i64: 2, 4, 256>}, {pipeline_mode = #tpu.pipeline_mode<synchronous>, transform_indices = @transform_1, window_bounds = array<i64: 4, 1>}, {pipeline_mode = #tpu.pipeline_mode<synchronous>, transform_indices = @transform_2, window_bounds = array<i64: 4, 1>}, {pipeline_mode = #tpu.pipeline_mode<synchronous>, transform_indices = @transform_3, window_bounds = array<i64: 4, 36>}, {transform_indices = @transform_4, window_bounds = array<i64: 2, 4, 256>}, {transform_indices = @transform_5, window_bounds = array<i64: 1, 4, 2>}]} {
    %c0 = arith.constant 0 : index
    %c0_0 = arith.constant 0 : index
    %c0_1 = arith.constant 0 : index
    %0 = vector.load %arg1[%c0, %c0_0, %c0_1] : memref<2x4x256xbf16, #tpu.memory_space<vmem>>, vector<2x4x256xbf16>
    %1 = arith.extf %0 : vector<2x4x256xbf16> to vector<2x4x256xf32>
    %c0_2 = arith.constant 0 : index
    %c0_3 = arith.constant 0 : index
    %2 = vector.load %arg2[%c0_2, %c0_3] : memref<4x1xf32, #tpu.memory_space<vmem>>, vector<4x1xf32>
    %3 = vector.shape_cast %2 : vector<4x1xf32> to vector<1x4x1xf32>
    %4 = vector.broadcast %3 : vector<1x4x1xf32> to vector<2x4x256xf32>
    %5 = arith.mulf %1, %4 : vector<2x4x256xf32>
    %c0_4 = arith.constant 0 : index
    %c0_5 = arith.constant 0 : index
    %6 = vector.load %arg3[%c0_4, %c0_5] : memref<4x1xf32, #tpu.memory_space<vmem>>, vector<4x1xf32>
    %7 = vector.shape_cast %6 : vector<4x1xf32> to vector<1x4x1xf32>
    %8 = vector.broadcast %7 : vector<1x4x1xf32> to vector<2x4x256xf32>
    %9 = arith.addf %5, %8 : vector<2x4x256xf32>
    %cst = arith.constant 0.000000e+00 : f32
    %10 = vector.broadcast %cst : f32 to vector<2x4x256xf32>
    %11 = arith.maximumf %9, %10 : vector<2x4x256xf32>
    %12 = arith.truncf %11 : vector<2x4x256xf32> to vector<2x4x256xbf16>
    %13 = tpu.iota {dimensions = array<i32: 1>} : vector<1x256xi32>
    %c16_i32 = arith.constant 16 : i32
    %c0_i32 = arith.constant 0 : i32
    %14 = arith.cmpi eq, %c16_i32, %c0_i32 : i32
    %c1_i32 = arith.constant 1 : i32
    %15 = arith.select %14, %c1_i32, %c16_i32 : i32
    %16 = vector.broadcast %15 : i32 to vector<1x256xi32>
    %17 = arith.remsi %13, %16 : vector<1x256xi32>
    %c0_i32_6 = arith.constant 0 : i32
    %18 = vector.broadcast %c0_i32_6 : i32 to vector<1x256xi32>
    %19 = arith.cmpi ne, %17, %18 : vector<1x256xi32>
    %c0_i32_7 = arith.constant 0 : i32
    %20 = vector.broadcast %c0_i32_7 : i32 to vector<1x256xi32>
    %21 = arith.cmpi slt, %17, %20 : vector<1x256xi32>
    %c0_i32_8 = arith.constant 0 : i32
    %22 = arith.cmpi slt, %15, %c0_i32_8 : i32
    %23 = vector.broadcast %22 : i1 to vector<1x256xi1>
    %24 = vector.broadcast %23 : vector<1x256xi1> to vector<1x256xi1>
    %25 = arith.xori %21, %24 : vector<1x256xi1>
    %26 = arith.andi %25, %19 : vector<1x256xi1>
    %27 = vector.broadcast %15 : i32 to vector<1x256xi32>
    %28 = arith.addi %17, %27 : vector<1x256xi32>
    %29 = arith.select %26, %28, %17 : vector<1x256xi1>, vector<1x256xi32>
    %c1_i32_9 = arith.constant 1 : i32
    %30 = vector.broadcast %c1_i32_9 : i32 to vector<1x256xi32>
    %31 = arith.cmpi sge, %29, %30 : vector<1x256xi32>
    %c14_i32 = arith.constant 14 : i32
    %32 = vector.broadcast %c14_i32 : i32 to vector<1x256xi32>
    %33 = arith.cmpi sle, %29, %32 : vector<1x256xi32>
    %cst_10 = arith.constant 0.000000e+00 : bf16
    %34 = vector.broadcast %cst_10 : bf16 to vector<4x17xbf16>
    %35 = vector.extract_strided_slice %12 {offsets = [0, 0, 0], sizes = [1, 4, 256], strides = [1, 1, 1]} : vector<2x4x256xbf16> to vector<1x4x256xbf16>
    %36 = vector.shape_cast %35 : vector<1x4x256xbf16> to vector<4x256xbf16>
    %37 = tpu.concatenate %34, %36, %34 in 1 : vector<4x17xbf16>, vector<4x256xbf16>, vector<4x17xbf16> -> vector<4x290xbf16>
    %38 = vector.extract_strided_slice %37 {offsets = [0, 0], sizes = [4, 256], strides = [1, 1]} : vector<4x290xbf16> to vector<4x256xbf16>
    %c0_i32_11 = arith.constant 0 : i32
    %39 = arith.sitofp %c0_i32_11 : i32 to bf16
    %40 = vector.shape_cast %31 : vector<1x256xi1> to vector<1x256xi1>
    %41 = vector.broadcast %40 : vector<1x256xi1> to vector<4x256xi1>
    %42 = vector.broadcast %39 : bf16 to vector<4x256xbf16>
    %43 = arith.select %41, %38, %42 : vector<4x256xi1>, vector<4x256xbf16>
    %44 = vector.extract_strided_slice %37 {offsets = [0, 1], sizes = [4, 256], strides = [1, 1]} : vector<4x290xbf16> to vector<4x256xbf16>
    %45 = vector.extract_strided_slice %37 {offsets = [0, 2], sizes = [4, 256], strides = [1, 1]} : vector<4x290xbf16> to vector<4x256xbf16>
    %c0_i32_12 = arith.constant 0 : i32
    %46 = arith.sitofp %c0_i32_12 : i32 to bf16
    %47 = vector.shape_cast %33 : vector<1x256xi1> to vector<1x256xi1>
    %48 = vector.broadcast %47 : vector<1x256xi1> to vector<4x256xi1>
    %49 = vector.broadcast %46 : bf16 to vector<4x256xbf16>
    %50 = arith.select %48, %45, %49 : vector<4x256xi1>, vector<4x256xbf16>
    %51 = vector.extract_strided_slice %37 {offsets = [0, 16], sizes = [4, 256], strides = [1, 1]} : vector<4x290xbf16> to vector<4x256xbf16>
    %c0_i32_13 = arith.constant 0 : i32
    %52 = arith.sitofp %c0_i32_13 : i32 to bf16
    %53 = vector.shape_cast %31 : vector<1x256xi1> to vector<1x256xi1>
    %54 = vector.broadcast %53 : vector<1x256xi1> to vector<4x256xi1>
    %55 = vector.broadcast %52 : bf16 to vector<4x256xbf16>
    %56 = arith.select %54, %51, %55 : vector<4x256xi1>, vector<4x256xbf16>
    %57 = vector.extract_strided_slice %37 {offsets = [0, 17], sizes = [4, 256], strides = [1, 1]} : vector<4x290xbf16> to vector<4x256xbf16>
    %58 = vector.extract_strided_slice %37 {offsets = [0, 18], sizes = [4, 256], strides = [1, 1]} : vector<4x290xbf16> to vector<4x256xbf16>
    %c0_i32_14 = arith.constant 0 : i32
    %59 = arith.sitofp %c0_i32_14 : i32 to bf16
    %60 = vector.shape_cast %33 : vector<1x256xi1> to vector<1x256xi1>
    %61 = vector.broadcast %60 : vector<1x256xi1> to vector<4x256xi1>
    %62 = vector.broadcast %59 : bf16 to vector<4x256xbf16>
    %63 = arith.select %61, %58, %62 : vector<4x256xi1>, vector<4x256xbf16>
    %64 = vector.extract_strided_slice %37 {offsets = [0, 32], sizes = [4, 256], strides = [1, 1]} : vector<4x290xbf16> to vector<4x256xbf16>
    %c0_i32_15 = arith.constant 0 : i32
    %65 = arith.sitofp %c0_i32_15 : i32 to bf16
    %66 = vector.shape_cast %31 : vector<1x256xi1> to vector<1x256xi1>
    %67 = vector.broadcast %66 : vector<1x256xi1> to vector<4x256xi1>
    %68 = vector.broadcast %65 : bf16 to vector<4x256xbf16>
    %69 = arith.select %67, %64, %68 : vector<4x256xi1>, vector<4x256xbf16>
    %70 = vector.extract_strided_slice %37 {offsets = [0, 33], sizes = [4, 256], strides = [1, 1]} : vector<4x290xbf16> to vector<4x256xbf16>
    %71 = vector.extract_strided_slice %37 {offsets = [0, 34], sizes = [4, 256], strides = [1, 1]} : vector<4x290xbf16> to vector<4x256xbf16>
    %c0_i32_16 = arith.constant 0 : i32
    %72 = arith.sitofp %c0_i32_16 : i32 to bf16
    %73 = vector.shape_cast %33 : vector<1x256xi1> to vector<1x256xi1>
    %74 = vector.broadcast %73 : vector<1x256xi1> to vector<4x256xi1>
    %75 = vector.broadcast %72 : bf16 to vector<4x256xbf16>
    %76 = arith.select %74, %71, %75 : vector<4x256xi1>, vector<4x256xbf16>
    %77 = tpu.concatenate %43, %44, %50, %56, %57, %63, %69, %70, %76 in 0 : vector<4x256xbf16>, vector<4x256xbf16>, vector<4x256xbf16>, vector<4x256xbf16>, vector<4x256xbf16>, vector<4x256xbf16>, vector<4x256xbf16>, vector<4x256xbf16>, vector<4x256xbf16> -> vector<36x256xbf16>
    %78 = vector.extract_strided_slice %12 {offsets = [1, 0, 0], sizes = [1, 4, 256], strides = [1, 1, 1]} : vector<2x4x256xbf16> to vector<1x4x256xbf16>
    %79 = vector.shape_cast %78 : vector<1x4x256xbf16> to vector<4x256xbf16>
    %80 = tpu.concatenate %34, %79, %34 in 1 : vector<4x17xbf16>, vector<4x256xbf16>, vector<4x17xbf16> -> vector<4x290xbf16>
    %81 = vector.extract_strided_slice %80 {offsets = [0, 0], sizes = [4, 256], strides = [1, 1]} : vector<4x290xbf16> to vector<4x256xbf16>
    %c0_i32_17 = arith.constant 0 : i32
    %82 = arith.sitofp %c0_i32_17 : i32 to bf16
    %83 = vector.shape_cast %31 : vector<1x256xi1> to vector<1x256xi1>
    %84 = vector.broadcast %83 : vector<1x256xi1> to vector<4x256xi1>
    %85 = vector.broadcast %82 : bf16 to vector<4x256xbf16>
    %86 = arith.select %84, %81, %85 : vector<4x256xi1>, vector<4x256xbf16>
    %87 = vector.extract_strided_slice %80 {offsets = [0, 1], sizes = [4, 256], strides = [1, 1]} : vector<4x290xbf16> to vector<4x256xbf16>
    %88 = vector.extract_strided_slice %80 {offsets = [0, 2], sizes = [4, 256], strides = [1, 1]} : vector<4x290xbf16> to vector<4x256xbf16>
    %c0_i32_18 = arith.constant 0 : i32
    %89 = arith.sitofp %c0_i32_18 : i32 to bf16
    %90 = vector.shape_cast %33 : vector<1x256xi1> to vector<1x256xi1>
    %91 = vector.broadcast %90 : vector<1x256xi1> to vector<4x256xi1>
    %92 = vector.broadcast %89 : bf16 to vector<4x256xbf16>
    %93 = arith.select %91, %88, %92 : vector<4x256xi1>, vector<4x256xbf16>
    %94 = vector.extract_strided_slice %80 {offsets = [0, 16], sizes = [4, 256], strides = [1, 1]} : vector<4x290xbf16> to vector<4x256xbf16>
    %c0_i32_19 = arith.constant 0 : i32
    %95 = arith.sitofp %c0_i32_19 : i32 to bf16
    %96 = vector.shape_cast %31 : vector<1x256xi1> to vector<1x256xi1>
    %97 = vector.broadcast %96 : vector<1x256xi1> to vector<4x256xi1>
    %98 = vector.broadcast %95 : bf16 to vector<4x256xbf16>
    %99 = arith.select %97, %94, %98 : vector<4x256xi1>, vector<4x256xbf16>
    %100 = vector.extract_strided_slice %80 {offsets = [0, 17], sizes = [4, 256], strides = [1, 1]} : vector<4x290xbf16> to vector<4x256xbf16>
    %101 = vector.extract_strided_slice %80 {offsets = [0, 18], sizes = [4, 256], strides = [1, 1]} : vector<4x290xbf16> to vector<4x256xbf16>
    %c0_i32_20 = arith.constant 0 : i32
    %102 = arith.sitofp %c0_i32_20 : i32 to bf16
    %103 = vector.shape_cast %33 : vector<1x256xi1> to vector<1x256xi1>
    %104 = vector.broadcast %103 : vector<1x256xi1> to vector<4x256xi1>
    %105 = vector.broadcast %102 : bf16 to vector<4x256xbf16>
    %106 = arith.select %104, %101, %105 : vector<4x256xi1>, vector<4x256xbf16>
    %107 = vector.extract_strided_slice %80 {offsets = [0, 32], sizes = [4, 256], strides = [1, 1]} : vector<4x290xbf16> to vector<4x256xbf16>
    %c0_i32_21 = arith.constant 0 : i32
    %108 = arith.sitofp %c0_i32_21 : i32 to bf16
    %109 = vector.shape_cast %31 : vector<1x256xi1> to vector<1x256xi1>
    %110 = vector.broadcast %109 : vector<1x256xi1> to vector<4x256xi1>
    %111 = vector.broadcast %108 : bf16 to vector<4x256xbf16>
    %112 = arith.select %110, %107, %111 : vector<4x256xi1>, vector<4x256xbf16>
    %113 = vector.extract_strided_slice %80 {offsets = [0, 33], sizes = [4, 256], strides = [1, 1]} : vector<4x290xbf16> to vector<4x256xbf16>
    %114 = vector.extract_strided_slice %80 {offsets = [0, 34], sizes = [4, 256], strides = [1, 1]} : vector<4x290xbf16> to vector<4x256xbf16>
    %c0_i32_22 = arith.constant 0 : i32
    %115 = arith.sitofp %c0_i32_22 : i32 to bf16
    %116 = vector.shape_cast %33 : vector<1x256xi1> to vector<1x256xi1>
    %117 = vector.broadcast %116 : vector<1x256xi1> to vector<4x256xi1>
    %118 = vector.broadcast %115 : bf16 to vector<4x256xbf16>
    %119 = arith.select %117, %114, %118 : vector<4x256xi1>, vector<4x256xbf16>
    %120 = tpu.concatenate %86, %87, %93, %99, %100, %106, %112, %113, %119 in 0 : vector<4x256xbf16>, vector<4x256xbf16>, vector<4x256xbf16>, vector<4x256xbf16>, vector<4x256xbf16>, vector<4x256xbf16>, vector<4x256xbf16>, vector<4x256xbf16>, vector<4x256xbf16> -> vector<36x256xbf16>
    %121 = tpu.concatenate %77, %120 in 1 : vector<36x256xbf16>, vector<36x256xbf16> -> vector<36x512xbf16>
    %c0_23 = arith.constant 0 : index
    %c0_24 = arith.constant 0 : index
    %122 = vector.load %arg4[%c0_23, %c0_24] : memref<4x36xbf16, #tpu.memory_space<vmem>>, vector<4x36xbf16>
    %cst_25 = arith.constant dense<0.000000e+00> : vector<4x512xf32>
    %123 = tpu.matmul %122, %121, %cst_25 {dimension_numbers = #tpu.dot_dimension_numbers<[1], [0], [0], [1], [0, 0, 1, 1], [], []>} : vector<4x36xbf16>, vector<36x512xbf16>, vector<4x512xf32> -> vector<4x512xf32>
    %124 = vector.extract_strided_slice %123 {offsets = [0, 0], sizes = [4, 256], strides = [1, 1]} : vector<4x512xf32> to vector<4x256xf32>
    %125 = arith.truncf %124 : vector<4x256xf32> to vector<4x256xbf16>
    %c0_26 = arith.constant 0 : index
    %c0_27 = arith.constant 0 : index
    %c0_28 = arith.constant 0 : index
    %126 = vector.load %arg5[%c0_26, %c0_27, %c0_28] : memref<2x4x256xbf16, #tpu.memory_space<vmem>>, vector<1x4x256xbf16>
    %127 = vector.shape_cast %126 : vector<1x4x256xbf16> to vector<4x256xbf16>
    %128 = vector.shape_cast %125 : vector<4x256xbf16> to vector<1x4x256xbf16>
    tpu.vector_store %arg5[%c0_26, %c0_27, %c0_28], %128 {strides = array<i32>} : memref<2x4x256xbf16, #tpu.memory_space<vmem>>, vector<1x4x256xbf16>,
    %129 = vector.extract_strided_slice %123 {offsets = [0, 256], sizes = [4, 256], strides = [1, 1]} : vector<4x512xf32> to vector<4x256xf32>
    %130 = arith.truncf %129 : vector<4x256xf32> to vector<4x256xbf16>
    %c1 = arith.constant 1 : index
    %c0_29 = arith.constant 0 : index
    %c0_30 = arith.constant 0 : index
    %131 = vector.load %arg5[%c1, %c0_29, %c0_30] : memref<2x4x256xbf16, #tpu.memory_space<vmem>>, vector<1x4x256xbf16>
    %132 = vector.shape_cast %131 : vector<1x4x256xbf16> to vector<4x256xbf16>
    %133 = vector.shape_cast %130 : vector<4x256xbf16> to vector<1x4x256xbf16>
    tpu.vector_store %arg5[%c1, %c0_29, %c0_30], %133 {strides = array<i32>} : memref<2x4x256xbf16, #tpu.memory_space<vmem>>, vector<1x4x256xbf16>,
    %cst_31 = arith.constant dense<0.000000e+00> : vector<4xf32>
    %134 = vector.multi_reduction <add>, %123, %cst_31 [1] : vector<4x512xf32> to vector<4xf32>
    %135 = vector.shape_cast %134 : vector<4xf32> to vector<4x1xf32>
    %136 = arith.mulf %123, %123 : vector<4x512xf32>
    %cst_32 = arith.constant dense<0.000000e+00> : vector<4xf32>
    %137 = vector.multi_reduction <add>, %136, %cst_32 [1] : vector<4x512xf32> to vector<4xf32>
    %138 = vector.shape_cast %137 : vector<4xf32> to vector<4x1xf32>
    %139 = tpu.concatenate %135, %138 in 1 : vector<4x1xf32>, vector<4x1xf32> -> vector<4x2xf32>
    %c0_33 = arith.constant 0 : index
    %c0_34 = arith.constant 0 : index
    %c0_35 = arith.constant 0 : index
    %140 = vector.load %arg6[%c0_33, %c0_34, %c0_35] : memref<1x4x2xf32, #tpu.memory_space<vmem>>, vector<1x4x2xf32>
    %141 = vector.shape_cast %140 : vector<1x4x2xf32> to vector<4x2xf32>
    %142 = vector.shape_cast %139 : vector<4x2xf32> to vector<1x4x2xf32>
    tpu.vector_store %arg6[%c0_33, %c0_34, %c0_35], %142 {strides = array<i32>} : memref<1x4x2xf32, #tpu.memory_space<vmem>>, vector<1x4x2xf32>,
    return
  }
  func.func @transform_0(%arg0: i32) -> (i32, i32, i32) {
    %c0_i32 = arith.constant 0 : i32
    %c0_i32_0 = arith.constant 0 : i32
    %c0_i32_1 = arith.constant 0 : i32
    return %arg0, %c0_i32, %c0_i32_0 : i32, i32, i32
  }
  func.func @transform_1(%arg0: i32) -> (i32, i32) {
    %c0_i32 = arith.constant 0 : i32
    %c0_i32_0 = arith.constant 0 : i32
    %c0_i32_1 = arith.constant 0 : i32
    return %c0_i32, %c0_i32_0 : i32, i32
  }
  func.func @transform_2(%arg0: i32) -> (i32, i32) {
    %c0_i32 = arith.constant 0 : i32
    %c0_i32_0 = arith.constant 0 : i32
    %c0_i32_1 = arith.constant 0 : i32
    return %c0_i32, %c0_i32_0 : i32, i32
  }
  func.func @transform_3(%arg0: i32) -> (i32, i32) {
    %c0_i32 = arith.constant 0 : i32
    %c0_i32_0 = arith.constant 0 : i32
    %c0_i32_1 = arith.constant 0 : i32
    return %c0_i32, %c0_i32_0 : i32, i32
  }
  func.func @transform_4(%arg0: i32) -> (i32, i32, i32) {
    %c0_i32 = arith.constant 0 : i32
    %c0_i32_0 = arith.constant 0 : i32
    %c0_i32_1 = arith.constant 0 : i32
    return %arg0, %c0_i32, %c0_i32_0 : i32, i32, i32
  }
  func.func @transform_5(%arg0: i32) -> (i32, i32, i32) {
    %c0_i32 = arith.constant 0 : i32
    %c0_i32_0 = arith.constant 0 : i32
    %c0_i32_1 = arith.constant 0 : i32
    return %arg0, %c0_i32, %c0_i32_0 : i32, i32, i32
  }
}

module attributes {stable_mosaic.version = 11 : i64} {
  func.func @_bn_residual_relu_kernel(%arg0: i32, %arg1: memref<8x256xbf16, #tpu.memory_space<vmem>>, %arg2: memref<8x256xf32, #tpu.memory_space<vmem>>, %arg3: memref<8x1xf32, #tpu.memory_space<vmem>>, %arg4: memref<8x1xf32, #tpu.memory_space<vmem>>, %arg5: memref<8x256xf32, #tpu.memory_space<vmem>>) attributes {dimension_semantics = [#tpu.dimension_semantics<parallel>], iteration_bounds = array<i64: 1>, scalar_prefetch = 0 : i64, scratch_operands = 0 : i64, tpu.core_type = #tpu.core_type<tc>, window_params = [{transform_indices = @transform_0, window_bounds = array<i64: 8, 256>}, {transform_indices = @transform_1, window_bounds = array<i64: 8, 256>}, {transform_indices = @transform_2, window_bounds = array<i64: 8, 1>}, {transform_indices = @transform_3, window_bounds = array<i64: 8, 1>}, {transform_indices = @transform_4, window_bounds = array<i64: 8, 256>}]} {
    %c0 = arith.constant 0 : index
    %c0_0 = arith.constant 0 : index
    %0 = vector.load %arg1[%c0, %c0_0] : memref<8x256xbf16, #tpu.memory_space<vmem>>, vector<8x256xbf16>
    %1 = arith.extf %0 : vector<8x256xbf16> to vector<8x256xf32>
    %c0_1 = arith.constant 0 : index
    %c0_2 = arith.constant 0 : index
    %2 = vector.load %arg3[%c0_1, %c0_2] : memref<8x1xf32, #tpu.memory_space<vmem>>, vector<8x1xf32>
    %3 = vector.broadcast %2 : vector<8x1xf32> to vector<8x256xf32>
    %4 = arith.mulf %1, %3 : vector<8x256xf32>
    %c0_3 = arith.constant 0 : index
    %c0_4 = arith.constant 0 : index
    %5 = vector.load %arg4[%c0_3, %c0_4] : memref<8x1xf32, #tpu.memory_space<vmem>>, vector<8x1xf32>
    %6 = vector.broadcast %5 : vector<8x1xf32> to vector<8x256xf32>
    %7 = arith.addf %4, %6 : vector<8x256xf32>
    %c0_5 = arith.constant 0 : index
    %c0_6 = arith.constant 0 : index
    %8 = vector.load %arg2[%c0_5, %c0_6] : memref<8x256xf32, #tpu.memory_space<vmem>>, vector<8x256xf32>
    %9 = arith.addf %7, %8 : vector<8x256xf32>
    %cst = arith.constant 0.000000e+00 : f32
    %10 = vector.broadcast %cst : f32 to vector<8x256xf32>
    %11 = arith.maximumf %9, %10 : vector<8x256xf32>
    %c0_7 = arith.constant 0 : index
    %c0_8 = arith.constant 0 : index
    %12 = vector.load %arg5[%c0_7, %c0_8] : memref<8x256xf32, #tpu.memory_space<vmem>>, vector<8x256xf32>
    tpu.vector_store %arg5[%c0_7, %c0_8], %11 {strides = array<i32>} : memref<8x256xf32, #tpu.memory_space<vmem>>, vector<8x256xf32>,
    return
  }
  func.func @transform_0(%arg0: i32) -> (i32, i32) {
    %c0_i32 = arith.constant 0 : i32
    %c0_i32_0 = arith.constant 0 : i32
    return %arg0, %c0_i32 : i32, i32
  }
  func.func @transform_1(%arg0: i32) -> (i32, i32) {
    %c0_i32 = arith.constant 0 : i32
    %c0_i32_0 = arith.constant 0 : i32
    return %arg0, %c0_i32 : i32, i32
  }
  func.func @transform_2(%arg0: i32) -> (i32, i32) {
    %c0_i32 = arith.constant 0 : i32
    %c0_i32_0 = arith.constant 0 : i32
    return %arg0, %c0_i32 : i32, i32
  }
  func.func @transform_3(%arg0: i32) -> (i32, i32) {
    %c0_i32 = arith.constant 0 : i32
    %c0_i32_0 = arith.constant 0 : i32
    return %arg0, %c0_i32 : i32, i32
  }
  func.func @transform_4(%arg0: i32) -> (i32, i32) {
    %c0_i32 = arith.constant 0 : i32
    %c0_i32_0 = arith.constant 0 : i32
    return %arg0, %c0_i32 : i32, i32
  }
}

</mosaic_0001>

<llo_original>
// kernel: basic_block_forward.5
$region0: #{basic_block_forward.5}
  #allocation0 [shape = 'u32[]', space=smem, size = 0x4, offset = 0x4, fixed_abs, tag = 'smem constant byte address 0x4 - core index']
  #allocation1 [shape = 'u32[144,128]{1,0:T(1,128)}', space=vmem, size = 0x12000, scoped, tag = 'internal scratch']
  %s0 = inlined_call_operand.vmem [shape: bf16[8,256], index: 0, kind: input, shape index: {}]
  %s1 = inlined_call_operand.vmem [shape: f32[8,256], index: 1, kind: input, shape index: {}]
  %s2 = inlined_call_operand.vmem [shape: f32[8,1], index: 2, kind: input, shape index: {}]
  %s3 = inlined_call_operand.vmem [shape: f32[8,1], index: 3, kind: input, shape index: {}]
  %s4 = inlined_call_operand.vmem [shape: f32[8,256], index: 4, kind: output, shape index: {}]
  %s5 = sld [smem:[#allocation0]]
  $region26: #{basic_block_forward.5} parent=0
    _
  %s7 = ssub.s32 1, %s5
  %s8 = scalar_select 0, %s7, %s5
  // Predicated region
  $region2: #{basic_block_forward.5} parent=0 // pred_check
    _
  $region3: #{basic_block_forward.5} parent=0 // pred_check_branch
    %10 = sbr.rel (0) target = $region5
  $region4: #{basic_block_forward.5} parent=0 // pred_region
    _
  $region5: #{basic_block_forward.5} parent=0 // pred_fallthru
    _
  // Predicated region
  $region6: #{basic_block_forward.5} parent=0 // pred_check
    _
  $region7: #{basic_block_forward.5} parent=0 // pred_check_branch
    %12 = sbr.rel (0) target = $region9
  $region8: #{basic_block_forward.5} parent=0 // pred_region
    _
  $region9: #{basic_block_forward.5} parent=0 // pred_fallthru
    _
  // Predicated region
  $region10: #{basic_block_forward.5} parent=0 // pred_check
    _
  $region11: #{basic_block_forward.5} parent=0 // pred_check_branch
    %14 = sbr.rel (0) target = $region13
  $region12: #{basic_block_forward.5} parent=0 // pred_region
    _
  $region13: #{basic_block_forward.5} parent=0 // pred_fallthru
    _
  // Predicated region
  $region14: #{basic_block_forward.5} parent=0 // pred_check
    _
  $region15: #{basic_block_forward.5} parent=0 // pred_check_branch
    %16 = sbr.rel (0) target = $region17
  $region16: #{basic_block_forward.5} parent=0 // pred_region
    _
  $region17: #{basic_block_forward.5} parent=0 // pred_fallthru
    _
  %v17 = vld [vmem:[%s0] sm:$0xff]
  %v18 = vunpack.c.l.bf16 %v17
  %v19 = vunpack.c.h.bf16 %v17
  %v20 = vld [vmem:[%s2] sm:$0xff]
  %22 = vset.pattern.permute.xlu0 0
  %23 = vperm.xlu0 %22, %v20
  %v24 = vpop.permute.xlu0 %23
  %v26 = vmul.f32 %v18, %v24
  %v27 = vmul.f32 %v19, %v24
  %v28 = vld [vmem:[%s3] sm:$0xff]
  %30 = vset.pattern.permute.xlu0 0
  %31 = vperm.xlu0 %30, %v28
  %v32 = vpop.permute.xlu0 %31
  %v34 = vadd.f32 %v26, %v32
  %v35 = vadd.f32 %v27, %v32
  %v36 = vld [vmem:[%s1] sm:$0xff]
  %v37 = vld [vmem:[%s1 + $0x8] sm:$0xff]
  %v38 = vadd.f32 %v34, %v36
  %v39 = vadd.f32 %v35, %v37
  %v40 = vmax.f32 %v38, 0.0
  %v41 = vmax.f32 %v39, 0.0
  %42 = vst [vmem:[%s4] sm:$0xff] %v40
  %43 = vst [vmem:[%s4 + $0x8] sm:$0xff] %v41
  // Predicated region
  $region18: #{basic_block_forward.5} parent=0 // pred_check
    _
  $region19: #{basic_block_forward.5} parent=0 // pred_check_branch
    %45 = sbr.rel (0) target = $region21
  $region20: #{basic_block_forward.5} parent=0 // pred_region
    _
  $region21: #{basic_block_forward.5} parent=0 // pred_fallthru
    _
  // Predicated region
  $region22: #{basic_block_forward.5} parent=0 // pred_check
    _
  $region23: #{basic_block_forward.5} parent=0 // pred_check_branch
    %47 = sbr.rel (0) target = $region25
  $region24: #{basic_block_forward.5} parent=0 // pred_region
    _
  $region25: #{basic_block_forward.5} parent=0 // pred_fallthru
    _

// kernel: basic_block_forward.3
$region0: #{basic_block_forward.3}
  #allocation0 [shape = 'u32[]', space=smem, size = 0x4, offset = 0x4, fixed_abs, tag = 'smem constant byte address 0x4 - core index']
  #allocation1 [shape = 'u32[144,128]{1,0:T(1,128)}', space=vmem, size = 0x12000, scoped, tag = 'internal scratch']
  %s0 = inlined_call_operand.vmem [shape: f32[2,4,256], index: 0, kind: input, shape index: {}]
  %s1 = inlined_call_operand.vmem [shape: bf16[4,36], index: 1, kind: input, shape index: {}]
  %s2 = inlined_call_operand.vmem [shape: bf16[2,4,256], index: 2, kind: output, shape index: {0}]
  %s3 = inlined_call_operand.vmem [shape: f32[1,4,2], index: 3, kind: output, shape index: {1}]
  %4 = xla_tuple %s2, %s3
  %s5 = sld [smem:[#allocation0]]
  $region26: #{basic_block_forward.3} parent=0
    _
  %s7 = ssub.s32 1, %s5
  %s8 = scalar_select 0, %s7, %s5
  // Predicated region
  $region2: #{basic_block_forward.3} parent=0 // pred_check
    _
  $region3: #{basic_block_forward.3} parent=0 // pred_check_branch
    %10 = sbr.rel (0) target = $region5
  $region4: #{basic_block_forward.3} parent=0 // pred_region
    _
  $region5: #{basic_block_forward.3} parent=0 // pred_fallthru
    _
  // Predicated region
  $region6: #{basic_block_forward.3} parent=0 // pred_check
    _
  $region7: #{basic_block_forward.3} parent=0 // pred_check_branch
    %12 = sbr.rel (0) target = $region9
  $region8: #{basic_block_forward.3} parent=0 // pred_region
    _
  $region9: #{basic_block_forward.3} parent=0 // pred_fallthru
    _
  %v16 = vld [vmem:[%s0] sm:$0xff]
  %v17 = vld [vmem:[%s0 + $0x8] sm:$0xff]
  %v20 = vcombine.high %v16, %v16
  %v21 = vcombine.high %v17, %v17
  %v24 = vpack.c.bf16 %v16, %v16
  %v25 = vpack.c.bf16 %v20, %v20
  %v26 = vpack.c.bf16 %v17, %v17
  %v27 = vpack.c.bf16 %v21, %v21
  %v28 = vlaneseq
  %v29 = vand.u32 %v28, 127
  %v30 = vadd.s32 %v29, 128
  %vm31 = vcmp.lt.s32.totalorder %v29, 0
  %v32 = vsub.s32 0, %v29
  %v33 = vsel %vm31, %v32, %v29
  %v34 = vshrl.u32 %v33, 4
  %v35 = vand.u32 %v33, 15
  %v36 = vsub.s32 0, %v35
  %v37 = vsel %vm31, %v36, %v35
  %vm38 = vcmp.lt.s32.totalorder %v30, 0
  %v39 = vsub.s32 0, %v30
  %v40 = vsel %vm38, %v39, %v30
  %v41 = vshrl.u32 %v40, 4
  %v42 = vand.u32 %v40, 15
  %v43 = vsub.s32 0, %v42
  %v44 = vsel %vm38, %v43, %v42
  %vm45 = vcmp.ne.s32.totalorder %v37, 0
  %vm46 = vcmp.ne.s32.totalorder %v44, 0
  %vm47 = vcmp.lt.s32.totalorder %v37, 0
  %vm48 = vcmp.lt.s32.totalorder %v44, 0
  %vm49 = vmand %vm47, %vm45
  %vm50 = vmand %vm48, %vm46
  %v51 = vadd.s32 %v37, 16
  %v52 = vadd.s32 %v44, 16
  %v53 = vsel %vm49, %v51, %v37
  %v54 = vsel %vm50, %v52, %v44
  %vm55 = vcmp.ge.s32.totalorder %v53, 1
  %vm56 = vcmp.ge.s32.totalorder %v54, 1
  %vm57 = vcmp.le.s32.totalorder %v53, 14
  %vm58 = vcmp.le.s32.totalorder %v54, 14
  %61 = vrot.lane.b32.xlu0 %v24, 17
  %v62 = vpop.permute.xlu0 %61
  %63 = vrot.lane.b32.xlu0 %v25, 17
  %v64 = vpop.permute.xlu0 %63
  %vm65 = vcmask 138240
  %v66 = vsel %vm65, %v62, %v64
  %vm68 = vcmask 138240
  %v71 = vsel %vm68, 0, %v62
  %v74 = vsel %vm68, %v64, 0
  %v76 = vsel %vm55, 1, 0
  %v77 = vsel %vm56, 1, 0
  %vm78 = vcmp.eq.s32.totalorder %v76, 1
  %vm79 = vcmp.eq.s32.totalorder %v77, 1
  %vm80 = vmpackc.low %vm79, %vm78
  %v81 = vsel %vm80, 65537, 0
  %v82 = vlaneseq
  %v83 = vshrl.u32 %v82, 7
  %v84 = vsub.s32 0, %v83
  %v85 = vrot.slane %v81, %v84
  %v86 = vlaneseq
  %v87 = vshrl.u32 %v86, 7
  %v88 = vsub.s32 4, %v87
  %v89 = vrot.slane %v81, %v88
  %vm90 = vcmp.ne.s16.totalorder %v85, 0
  %vm91 = vcmp.ne.s16.totalorder %v89, 0
  %v92 = vsel %vm90, %v71, 0
  %v93 = vsel %vm91, %v66, 0
  %v94 = vsel %vm57, 1, 0
  %v95 = vsel %vm58, 1, 0
  %vm96 = vcmp.eq.s32.totalorder %v94, 1
  %vm97 = vcmp.eq.s32.totalorder %v95, 1
  %vm98 = vmpackc.low %vm97, %vm96
  %v99 = vsel %vm98, 65537, 0
  %v100 = vlaneseq
  %v101 = vshrl.u32 %v100, 7
  %v102 = vsub.s32 0, %v101
  %v103 = vrot.slane %v99, %v102
  %v104 = vlaneseq
  %v105 = vshrl.u32 %v104, 7
  %v106 = vsub.s32 4, %v105
  %v107 = vrot.slane %v99, %v106
  %108 = vrot.lane.b32.xlu0 %v103, 2
  %v109 = vpop.permute.xlu0 %108
  %110 = vrot.lane.b32.xlu0 %v107, 2
  %v111 = vpop.permute.xlu0 %110
  %vm112 = vcmask 15360
  %v113 = vsel %vm112, %v109, %v111
  %vm114 = vcmp.ne.s16.totalorder %v109, 0
  %vm115 = vcmp.ne.s16.totalorder %v113, 0
  %vm116 = vcmp.ne.s16.totalorder %v111, 0
  %v117 = vsel %vm114, %v71, 0
  %v118 = vsel %vm115, %v66, 0
  %v119 = vsel %vm116, %v74, 0
  %120 = vrot.lane.b32.xlu0 %v85, 16
  %v121 = vpop.permute.xlu0 %120
  %122 = vrot.lane.b32.xlu0 %v89, 16
  %v123 = vpop.permute.xlu0 %122
  %vm124 = vcmask 130048
  %v125 = vsel %vm124, %v121, %v123
  %vm126 = vcmp.ne.s16.totalorder %v121, 0
  %vm127 = vcmp.ne.s16.totalorder %v125, 0
  %vm128 = vcmp.ne.s16.totalorder %v123, 0
  %v129 = vsel %vm126, %v71, 0
  %v130 = vsel %vm127, %v66, 0
  %v131 = vsel %vm128, %v74, 0
  %132 = vrot.lane.b32.xlu0 %v103, 18
  %v133 = vpop.permute.xlu0 %132
  %134 = vrot.lane.b32.xlu0 %v107, 18
  %v135 = vpop.permute.xlu0 %134
  %vm136 = vcmask 146432
  %v137 = vsel %vm136, %v133, %v135
  %vm138 = vcmp.ne.s16.totalorder %v133, 0
  %vm139 = vcmp.ne.s16.totalorder %v137, 0
  %vm140 = vcmp.ne.s16.totalorder %v135, 0
  %v141 = vsel %vm138, %v71, 0
  %v142 = vsel %vm139, %v66, 0
  %v143 = vsel %vm140, %v74, 0
  %144 = vrot.lane.b32.xlu0 %v85, 32
  %v145 = vpop.permute.xlu0 %144
  %146 = vrot.lane.b32.xlu0 %v89, 32
  %v147 = vpop.permute.xlu0 %146
  %vm148 = vcmask 261120
  %v149 = vsel %vm148, %v145, %v147
  %vm150 = vcmp.ne.s16.totalorder %v145, 0
  %vm151 = vcmp.ne.s16.totalorder %v149, 0
  %vm152 = vcmp.ne.s16.totalorder %v147, 0
  %v153 = vsel %vm150, %v71, 0
  %v154 = vsel %vm151, %v66, 0
  %v155 = vsel %vm152, %v74, 0
  %156 = vrot.lane.b32.xlu0 %v103, 34
  %v157 = vpop.permute.xlu0 %156
  %158 = vrot.lane.b32.xlu0 %v107, 34
  %v159 = vpop.permute.xlu0 %158
  %vm160 = vcmask 277504
  %v161 = vsel %vm160, %v157, %v159
  %vm162 = vcmp.ne.s16.totalorder %v157, 0
  %vm163 = vcmp.ne.s16.totalorder %v161, 0
  %vm164 = vcmp.ne.s16.totalorder %v159, 0
  %v165 = vsel %vm162, %v71, 0
  %v166 = vsel %vm163, %v66, 0
  %v167 = vsel %vm164, %v74, 0
  %v170 = vrot.slane %v71, 6
  %v171 = vrot.slane %v66, 6
  %v172 = vrot.slane %v74, 6
  %173 = vrot.lane.b32.xlu0 %v170, 127
  %v174 = vpop.permute.xlu0 %173
  %175 = vrot.lane.b32.xlu0 %v171, 127
  %v176 = vpop.permute.xlu0 %175
  %177 = vrot.lane.b32.xlu0 %v172, 127
  %v178 = vpop.permute.xlu0 %177
  %vm179 = vcmask 1039360
  %v180 = vsel %vm179, %v174, %v176
  %v181 = vsel %vm179, %v176, %v178
  %v185 = vrot.slane %v117, 4
  %v186 = vrot.slane %v118, 4
  %v187 = vrot.slane %v119, 4
  %188 = vrot.lane.b32.xlu0 %v185, 126
  %v189 = vpop.permute.xlu0 %188
  %190 = vrot.lane.b32.xlu0 %v186, 126
  %v191 = vpop.permute.xlu0 %190
  %192 = vrot.lane.b32.xlu0 %v187, 126
  %v193 = vpop.permute.xlu0 %192
  %vm194 = vcmask 1031168
  %v195 = vsel %vm194, %v189, %v191
  %v196 = vsel %vm194, %v191, %v193
  %v200 = vrot.slane %v129, 2
  %v201 = vrot.slane %v130, 2
  %v202 = vrot.slane %v131, 2
  %203 = vrot.lane.b32.xlu0 %v200, 112
  %v204 = vpop.permute.xlu0 %203
  %205 = vrot.lane.b32.xlu0 %v201, 112
  %v206 = vpop.permute.xlu0 %205
  %207 = vrot.lane.b32.xlu0 %v202, 112
  %v208 = vpop.permute.xlu0 %207
  %vm209 = vcmask 916480
  %v210 = vsel %vm209, %v204, %v206
  %v211 = vsel %vm209, %v206, %v208
  %212 = vrot.lane.b32.xlu0 %v71, 111
  %v213 = vpop.permute.xlu0 %212
  %214 = vrot.lane.b32.xlu0 %v66, 111
  %v215 = vpop.permute.xlu0 %214
  %216 = vrot.lane.b32.xlu0 %v74, 111
  %v217 = vpop.permute.xlu0 %216
  %vm218 = vcmask 908288
  %v219 = vsel %vm218, %v213, %v215
  %v220 = vsel %vm218, %v215, %v217
  %v224 = vrot.slane %v141, 6
  %v225 = vrot.slane %v142, 6
  %v226 = vrot.slane %v143, 6
  %227 = vrot.lane.b32.xlu0 %v224, 110
  %v228 = vpop.permute.xlu0 %227
  %229 = vrot.lane.b32.xlu0 %v225, 110
  %v230 = vpop.permute.xlu0 %229
  %231 = vrot.lane.b32.xlu0 %v226, 110
  %v232 = vpop.permute.xlu0 %231
  %vm233 = vcmask 900096
  %v234 = vsel %vm233, %v228, %v230
  %v235 = vsel %vm233, %v230, %v232
  %v239 = vrot.slane %v153, 4
  %v240 = vrot.slane %v154, 4
  %v241 = vrot.slane %v155, 4
  %242 = vrot.lane.b32.xlu0 %v239, 96
  %v243 = vpop.permute.xlu0 %242
  %244 = vrot.lane.b32.xlu0 %v240, 96
  %v245 = vpop.permute.xlu0 %244
  %246 = vrot.lane.b32.xlu0 %v241, 96
  %v247 = vpop.permute.xlu0 %246
  %vm248 = vcmask 785408
  %v249 = vsel %vm248, %v243, %v245
  %v250 = vsel %vm248, %v245, %v247
  %v251 = vrot.slane %v71, 2
  %v252 = vrot.slane %v66, 2
  %v253 = vrot.slane %v74, 2
  %254 = vrot.lane.b32.xlu0 %v251, 95
  %v255 = vpop.permute.xlu0 %254
  %256 = vrot.lane.b32.xlu0 %v252, 95
  %v257 = vpop.permute.xlu0 %256
  %258 = vrot.lane.b32.xlu0 %v253, 95
  %v259 = vpop.permute.xlu0 %258
  %vm260 = vcmask 777216
  %v261 = vsel %vm260, %v255, %v257
  %v262 = vsel %vm260, %v257, %v259
  %266 = vrot.lane.b32.xlu0 %v165, 94
  %v267 = vpop.permute.xlu0 %266
  %268 = vrot.lane.b32.xlu0 %v166, 94
  %v269 = vpop.permute.xlu0 %268
  %270 = vrot.lane.b32.xlu0 %v167, 94
  %v271 = vpop.permute.xlu0 %270
  %vm272 = vcmask 769024
  %v273 = vsel %vm272, %v267, %v269
  %v274 = vsel %vm272, %v269, %v271
  %vm275 = vcmask 1041408
  %v278 = vsel %vm275, %v92, %v180
  %v281 = vsel %vm275, %v93, %v181
  %vm282 = vcmask 1043456
  %v284 = vsel %vm282, %v278, %v195
  %v286 = vsel %vm282, %v281, %v196
  %vm287 = vcmask 1045504
  %v289 = vsel %vm287, %v284, %v210
  %v292 = vsel %vm287, %v286, %v211
  %v296 = vsel %vm275, %v219, %v234
  %v299 = vsel %vm275, %v220, %v235
  %v301 = vsel %vm282, %v296, %v249
  %v303 = vsel %vm282, %v299, %v250
  %v305 = vsel %vm287, %v301, %v261
  %v308 = vsel %vm287, %v303, %v262
  %312 = vrot.lane.b32.xlu0 %v26, 17
  %v313 = vpop.permute.xlu0 %312
  %314 = vrot.lane.b32.xlu0 %v27, 17
  %v315 = vpop.permute.xlu0 %314
  %v316 = vsel %vm65, %v313, %v315
  %v319 = vsel %vm68, 0, %v313
  %v322 = vsel %vm68, %v315, 0
  %v324 = vsel %vm90, %v319, 0
  %v325 = vsel %vm91, %v316, 0
  %v326 = vsel %vm114, %v319, 0
  %v327 = vsel %vm115, %v316, 0
  %v328 = vsel %vm116, %v322, 0
  %v329 = vsel %vm126, %v319, 0
  %v330 = vsel %vm127, %v316, 0
  %v331 = vsel %vm128, %v322, 0
  %v332 = vsel %vm138, %v319, 0
  %v333 = vsel %vm139, %v316, 0
  %v334 = vsel %vm140, %v322, 0
  %v335 = vsel %vm150, %v319, 0
  %v336 = vsel %vm151, %v316, 0
  %v337 = vsel %vm152, %v322, 0
  %v338 = vsel %vm162, %v319, 0
  %v339 = vsel %vm163, %v316, 0
  %v340 = vsel %vm164, %v322, 0
  %v343 = vrot.slane %v319, 6
  %v344 = vrot.slane %v316, 6
  %v345 = vrot.slane %v322, 6
  %346 = vrot.lane.b32.xlu0 %v343, 127
  %v347 = vpop.permute.xlu0 %346
  %348 = vrot.lane.b32.xlu0 %v344, 127
  %v349 = vpop.permute.xlu0 %348
  %350 = vrot.lane.b32.xlu0 %v345, 127
  %v351 = vpop.permute.xlu0 %350
  %v352 = vsel %vm179, %v347, %v349
  %v353 = vsel %vm179, %v349, %v351
  %v357 = vrot.slane %v326, 4
  %v358 = vrot.slane %v327, 4
  %v359 = vrot.slane %v328, 4
  %360 = vrot.lane.b32.xlu0 %v357, 126
  %v361 = vpop.permute.xlu0 %360
  %362 = vrot.lane.b32.xlu0 %v358, 126
  %v363 = vpop.permute.xlu0 %362
  %364 = vrot.lane.b32.xlu0 %v359, 126
  %v365 = vpop.permute.xlu0 %364
  %v366 = vsel %vm194, %v361, %v363
  %v367 = vsel %vm194, %v363, %v365
  %v371 = vrot.slane %v329, 2
  %v372 = vrot.slane %v330, 2
  %v373 = vrot.slane %v331, 2
  %374 = vrot.lane.b32.xlu0 %v371, 112
  %v375 = vpop.permute.xlu0 %374
  %376 = vrot.lane.b32.xlu0 %v372, 112
  %v377 = vpop.permute.xlu0 %376
  %378 = vrot.lane.b32.xlu0 %v373, 112
  %v379 = vpop.permute.xlu0 %378
  %v380 = vsel %vm209, %v375, %v377
  %v381 = vsel %vm209, %v377, %v379
  %382 = vrot.lane.b32.xlu0 %v319, 111
  %v383 = vpop.permute.xlu0 %382
  %384 = vrot.lane.b32.xlu0 %v316, 111
  %v385 = vpop.permute.xlu0 %384
  %386 = vrot.lane.b32.xlu0 %v322, 111
  %v387 = vpop.permute.xlu0 %386
  %v388 = vsel %vm218, %v383, %v385
  %v389 = vsel %vm218, %v385, %v387
  %v393 = vrot.slane %v332, 6
  %v394 = vrot.slane %v333, 6
  %v395 = vrot.slane %v334, 6
  %396 = vrot.lane.b32.xlu0 %v393, 110
  %v397 = vpop.permute.xlu0 %396
  %398 = vrot.lane.b32.xlu0 %v394, 110
  %v399 = vpop.permute.xlu0 %398
  %400 = vrot.lane.b32.xlu0 %v395, 110
  %v401 = vpop.permute.xlu0 %400
  %v402 = vsel %vm233, %v397, %v399
  %v403 = vsel %vm233, %v399, %v401
  %v407 = vrot.slane %v335, 4
  %v408 = vrot.slane %v336, 4
  %v409 = vrot.slane %v337, 4
  %410 = vrot.lane.b32.xlu0 %v407, 96
  %v411 = vpop.permute.xlu0 %410
  %412 = vrot.lane.b32.xlu0 %v408, 96
  %v413 = vpop.permute.xlu0 %412
  %414 = vrot.lane.b32.xlu0 %v409, 96
  %v415 = vpop.permute.xlu0 %414
  %v416 = vsel %vm248, %v411, %v413
  %v417 = vsel %vm248, %v413, %v415
  %v418 = vrot.slane %v319, 2
  %v419 = vrot.slane %v316, 2
  %v420 = vrot.slane %v322, 2
  %421 = vrot.lane.b32.xlu0 %v418, 95
  %v422 = vpop.permute.xlu0 %421
  %423 = vrot.lane.b32.xlu0 %v419, 95
  %v424 = vpop.permute.xlu0 %423
  %425 = vrot.lane.b32.xlu0 %v420, 95
  %v426 = vpop.permute.xlu0 %425
  %v427 = vsel %vm260, %v422, %v424
  %v428 = vsel %vm260, %v424, %v426
  %432 = vrot.lane.b32.xlu0 %v338, 94
  %v433 = vpop.permute.xlu0 %432
  %434 = vrot.lane.b32.xlu0 %v339, 94
  %v435 = vpop.permute.xlu0 %434
  %436 = vrot.lane.b32.xlu0 %v340, 94
  %v437 = vpop.permute.xlu0 %436
  %v438 = vsel %vm272, %v433, %v435
  %v439 = vsel %vm272, %v435, %v437
  %v442 = vsel %vm275, %v324, %v352
  %v445 = vsel %vm275, %v325, %v353
  %v447 = vsel %vm282, %v442, %v366
  %v449 = vsel %vm282, %v445, %v367
  %v451 = vsel %vm287, %v447, %v380
  %v454 = vsel %vm287, %v449, %v381
  %v458 = vsel %vm275, %v388, %v402
  %v461 = vsel %vm275, %v389, %v403
  %v463 = vsel %vm282, %v458, %v416
  %v465 = vsel %vm282, %v461, %v417
  %v467 = vsel %vm287, %v463, %v427
  %v470 = vsel %vm287, %v465, %v428
  %v472 = vld [vmem:[%s1] sm:$0x3]
  %vm473 = vcmask 293888
  %v475 = vsel %vm473, %v472, 0
  %v478 = vsel %vm275, %v273, 0
  %v481 = vsel %vm275, %v274, 0
  %v484 = vsel %vm275, %v438, 0
  %v487 = vsel %vm275, %v439, 0
  %489 = vmatprep.subr.bf16.mxu0 %v292
  %490 = vmatpush1.bf16.msra.mxu0 %v289
  %491 = vmatprep.subr.bf16.mxu0 %v308
  %492 = vmatpush1.bf16.msra.mxu0 %v305
  %493 = vmatprep.subr.bf16.mxu0 %v481
  %494 = vmatpush1.bf16.msra.mxu0 %v478
  %495 = vmatprep.subr.bf16.mxu0 0
  %496 = vmatpush1.bf16.msra.mxu0 0
  %497 = vmatprep.subr.bf16.mxu0 0
  %498 = vmatpush1.bf16.msra.mxu0 0
  %499 = vmatprep.subr.bf16.mxu0 0
  %500 = vmatpush1.bf16.msra.mxu0 0
  %501 = vmatprep.subr.bf16.mxu0 0
  %502 = vmatpush1.bf16.msra.mxu0 0
  %503 = vmatprep.subr.bf16.mxu0 0
  %504 = vmatpush1.bf16.msra.mxu0 0
  %505 = vmatprep.subr.bf16.mxu0 0
  %506 = vmatpush1.bf16.msra.mxu0 0
  %507 = vmatprep.subr.bf16.mxu0 0
  %508 = vmatpush1.bf16.msra.mxu0 0
  %509 = vmatprep.subr.bf16.mxu0 0
  %510 = vmatpush1.bf16.msra.mxu0 0
  %511 = vmatprep.subr.bf16.mxu0 0
  %512 = vmatpush1.bf16.msra.mxu0 0
  %513 = vmatprep.subr.bf16.mxu0 0
  %514 = vmatpush1.bf16.msra.mxu0 0
  %515 = vmatprep.subr.bf16.mxu0 0
  %516 = vmatpush1.bf16.msra.mxu0 0
  %517 = vmatprep.subr.bf16.mxu0 0
  %518 = vmatpush1.bf16.msra.mxu0 0
  %519 = vmatprep.subr.bf16.mxu0 0
  %520 = vmatpush1.bf16.msra.mxu0 0
  %521 = vmatprep.mubr.bf16.mxu0 0
  %522 = vmatmul.mubr.bf16.gmra.mrb[0].mxu0 %v475
  %v523 = vpop.f32.mrb[0].mxu0
  %v524 = vadd.f32 0.0, %v523
  %v525 = vpop.f32.mrb[0].mxu0
  %v526 = vadd.f32 0.0, %v525
  %v527 = vpop.f32.mrb[0].mxu0
  %v528 = vpop.f32.mrb[0].mxu0
  %529 = vdwg.mxu0
  %530 = vmatprep.subr.bf16.mxu0 %v454
  %531 = vmatpush1.bf16.msra.mxu0 %v451
  %532 = vmatprep.subr.bf16.mxu0 %v470
  %533 = vmatpush1.bf16.msra.mxu0 %v467
  %534 = vmatprep.subr.bf16.mxu0 %v487
  %535 = vmatpush1.bf16.msra.mxu0 %v484
  %536 = vmatprep.subr.bf16.mxu0 0
  %537 = vmatpush1.bf16.msra.mxu0 0
  %538 = vmatprep.subr.bf16.mxu0 0
  %539 = vmatpush1.bf16.msra.mxu0 0
  %540 = vmatprep.subr.bf16.mxu0 0
  %541 = vmatpush1.bf16.msra.mxu0 0
  %542 = vmatprep.subr.bf16.mxu0 0
  %543 = vmatpush1.bf16.msra.mxu0 0
  %544 = vmatprep.subr.bf16.mxu0 0
  %545 = vmatpush1.bf16.msra.mxu0 0
  %546 = vmatprep.subr.bf16.mxu0 0
  %547 = vmatpush1.bf16.msra.mxu0 0
  %548 = vmatprep.subr.bf16.mxu0 0
  %549 = vmatpush1.bf16.msra.mxu0 0
  %550 = vmatprep.subr.bf16.mxu0 0
  %551 = vmatpush1.bf16.msra.mxu0 0
  %552 = vmatprep.subr.bf16.mxu0 0
  %553 = vmatpush1.bf16.msra.mxu0 0
  %554 = vmatprep.subr.bf16.mxu0 0
  %555 = vmatpush1.bf16.msra.mxu0 0
  %556 = vmatprep.subr.bf16.mxu0 0
  %557 = vmatpush1.bf16.msra.mxu0 0
  %558 = vmatprep.subr.bf16.mxu0 0
  %559 = vmatpush1.bf16.msra.mxu0 0
  %560 = vmatprep.subr.bf16.mxu0 0
  %561 = vmatpush1.bf16.msra.mxu0 0
  %562 = vmatprep.mubr.bf16.mxu0 0
  %563 = vmatmul.mubr.bf16.gmra.mrb[0].mxu0 %v475
  %v564 = vpop.f32.mrb[0].mxu0
  %v565 = vadd.f32 0.0, %v564
  %v566 = vpop.f32.mrb[0].mxu0
  %v567 = vadd.f32 0.0, %v566
  %v568 = vpop.f32.mrb[0].mxu0
  %v569 = vpop.f32.mrb[0].mxu0
  %570 = vdwg.mxu0
  %v571 = vpack.c.bf16 %v524, %v524
  %v572 = vpack.c.bf16 %v526, %v526
  %v575 = vcombine.low %v571, %v572
  %v577 = vunpack.c.l.s4 1983009808
  %v578 = vunpack.c.0.s8 %v577
  %v579 = vlaneseq
  %v580 = vshrl.u32 %v579, 7
  %v581 = vsub.s32 %v578, %v580
  %v582 = vrot.slane %v575, %v581
  %584 = vst [vmem:[%s2] sm:$0xf] %v582
  %v585 = vpack.c.bf16 %v565, %v565
  %v586 = vpack.c.bf16 %v567, %v567
  %v589 = vcombine.low %v585, %v586
  %v591 = vunpack.c.l.s4 1983009808
  %v592 = vunpack.c.0.s8 %v591
  %v593 = vlaneseq
  %v594 = vshrl.u32 %v593, 7
  %v595 = vsub.s32 %v592, %v594
  %v596 = vrot.slane %v589, %v595
  %s598 = scalar_lea.vmem %s2, 4
  %599 = vst [vmem:[%s598] sm:$0xf] %v596
  %v600 = vsel %vm282, %v524, 0.0
  %v601 = vsel %vm282, %v526, 0.0
  %v602 = vadd.f32 %v600, %v601
  %v603 = vsel %vm282, %v565, 0.0
  %v604 = vadd.f32 %v602, %v603
  %v605 = vsel %vm282, %v567, 0.0
  %v606 = vadd.f32 %v604, %v605
  %607 = vadd.xlane.f32.xlu0 %v606
  %v608 = vpop.xlane.xlu0 %607
  %v609 = vmul.f32 %v524, %v524
  %v610 = vmul.f32 %v526, %v526
  %v611 = vmul.f32 %v565, %v565
  %v612 = vmul.f32 %v567, %v567
  %v613 = vsel %vm282, %v609, 0.0
  %v614 = vsel %vm282, %v610, 0.0
  %v615 = vadd.f32 %v613, %v614
  %v616 = vsel %vm282, %v611, 0.0
  %v617 = vadd.f32 %v615, %v616
  %v618 = vsel %vm282, %v612, 0.0
  %v619 = vadd.f32 %v617, %v618
  %620 = vadd.xlane.f32.xlu0 %v619
  %v621 = vpop.xlane.xlu0 %620
  %vm622 = vcmask 7168
  %v623 = vsel %vm622, %v608, %v621
  %vm624 = vcmask 11264
  %625 = vst.msk [vmem:[%s3] sm:$0xf] %vm624, %v623
  // Predicated region
  $region10: #{basic_block_forward.3} parent=0 // pred_check
    _
  $region11: #{basic_block_forward.3} parent=0 // pred_check_branch
    %627 = sbr.rel (0) target = $region13
  $region12: #{basic_block_forward.3} parent=0 // pred_region
    _
  $region13: #{basic_block_forward.3} parent=0 // pred_fallthru
    _
  // Predicated region
  $region14: #{basic_block_forward.3} parent=0 // pred_check
    _
  $region15: #{basic_block_forward.3} parent=0 // pred_check_branch
    %629 = sbr.rel (0) target = $region17
  $region16: #{basic_block_forward.3} parent=0 // pred_region
    _
  $region17: #{basic_block_forward.3} parent=0 // pred_fallthru
    _
  // Predicated region
  $region18: #{basic_block_forward.3} parent=0 // pred_check
    _
  $region19: #{basic_block_forward.3} parent=0 // pred_check_branch
    %631 = sbr.rel (0) target = $region21
  $region20: #{basic_block_forward.3} parent=0 // pred_region
    _
  $region21: #{basic_block_forward.3} parent=0 // pred_fallthru
    _
  // Predicated region
  $region22: #{basic_block_forward.3} parent=0 // pred_check
    _
  $region23: #{basic_block_forward.3} parent=0 // pred_check_branch
    %633 = sbr.rel (0) target = $region25
  $region24: #{basic_block_forward.3} parent=0 // pred_region
    _
  $region25: #{basic_block_forward.3} parent=0 // pred_fallthru
    _

// kernel: basic_block_forward.4
$region0: #{basic_block_forward.4}
  #allocation0 [shape = 'u32[]', space=smem, size = 0x4, offset = 0x4, fixed_abs, tag = 'smem constant byte address 0x4 - core index']
  #allocation1 [shape = 'u32[144,128]{1,0:T(1,128)}', space=vmem, size = 0x12000, scoped, tag = 'internal scratch']
  %s0 = inlined_call_operand.vmem [shape: bf16[2,4,256], index: 0, kind: input, shape index: {}]
  %s1 = inlined_call_operand.vmem [shape: f32[4,1], index: 1, kind: input, shape index: {}]
  %s2 = inlined_call_operand.vmem [shape: f32[4,1], index: 2, kind: input, shape index: {}]
  %s3 = inlined_call_operand.vmem [shape: bf16[4,36], index: 3, kind: input, shape index: {}]
  %s4 = inlined_call_operand.vmem [shape: bf16[2,4,256], index: 4, kind: output, shape index: {0}]
  %s5 = inlined_call_operand.vmem [shape: f32[1,4,2], index: 5, kind: output, shape index: {1}]
  %6 = xla_tuple %s4, %s5
  %s7 = sld [smem:[#allocation0]]
  $region34: #{basic_block_forward.4} parent=0
    _
  %s9 = ssub.s32 1, %s7
  %s10 = scalar_select 0, %s9, %s7
  // Predicated region
  $region2: #{basic_block_forward.4} parent=0 // pred_check
    _
  $region3: #{basic_block_forward.4} parent=0 // pred_check_branch
    %12 = sbr.rel (0) target = $region5
  $region4: #{basic_block_forward.4} parent=0 // pred_region
    _
  $region5: #{basic_block_forward.4} parent=0 // pred_fallthru
    _
  // Predicated region
  $region6: #{basic_block_forward.4} parent=0 // pred_check
    _
  $region7: #{basic_block_forward.4} parent=0 // pred_check_branch
    %14 = sbr.rel (0) target = $region9
  $region8: #{basic_block_forward.4} parent=0 // pred_region
    _
  $region9: #{basic_block_forward.4} parent=0 // pred_fallthru
    _
  // Predicated region
  $region10: #{basic_block_forward.4} parent=0 // pred_check
    _
  $region11: #{basic_block_forward.4} parent=0 // pred_check_branch
    %16 = sbr.rel (0) target = $region13
  $region12: #{basic_block_forward.4} parent=0 // pred_region
    _
  $region13: #{basic_block_forward.4} parent=0 // pred_fallthru
    _
  // Predicated region
  $region14: #{basic_block_forward.4} parent=0 // pred_check
    _
  $region15: #{basic_block_forward.4} parent=0 // pred_check_branch
    %18 = sbr.rel (0) target = $region17
  $region16: #{basic_block_forward.4} parent=0 // pred_region
    _
  $region17: #{basic_block_forward.4} parent=0 // pred_fallthru
    _
  %v22 = vld [vmem:[%s0] sm:$0xf]
  %v23 = vld [vmem:[%s0 + $0x4] sm:$0xf]
  %v24 = vunpack.c.l.bf16 %v22
  %v25 = vunpack.c.l.bf16 %v23
  %v26 = vld [vmem:[%s1] sm:$0xf]
  %28 = vset.pattern.permute.xlu0 0
  %29 = vperm.xlu0 %28, %v26
  %v30 = vpop.permute.xlu0 %29
  %v32 = vunpack.c.l.s4 839922192
  %v33 = vunpack.c.0.s8 %v32
  %v34 = vlaneseq
  %v35 = vshrl.u32 %v34, 7
  %v36 = vsub.s32 %v33, %v35
  %v37 = vrot.slane %v30, %v36
  %v39 = vmul.f32 %v24, %v37
  %v40 = vmul.f32 %v25, %v37
  %v41 = vld [vmem:[%s2] sm:$0xf]
  %43 = vset.pattern.permute.xlu0 0
  %44 = vperm.xlu0 %43, %v41
  %v45 = vpop.permute.xlu0 %44
  %v47 = vunpack.c.l.s4 839922192
  %v48 = vunpack.c.0.s8 %v47
  %v49 = vlaneseq
  %v50 = vshrl.u32 %v49, 7
  %v51 = vsub.s32 %v48, %v50
  %v52 = vrot.slane %v45, %v51
  %v54 = vadd.f32 %v39, %v52
  %v55 = vadd.f32 %v40, %v52
  %v56 = vmax.f32 %v54, 0.0
  %v57 = vmax.f32 %v55, 0.0
  %v60 = vcombine.high %v56, %v56
  %v61 = vcombine.high %v57, %v57
  %v64 = vpack.c.bf16 %v56, %v56
  %v65 = vpack.c.bf16 %v60, %v60
  %v66 = vpack.c.bf16 %v57, %v57
  %v67 = vpack.c.bf16 %v61, %v61
  %v68 = vlaneseq
  %v69 = vand.u32 %v68, 127
  %v70 = vadd.s32 %v69, 128
  %vm71 = vcmp.lt.s32.totalorder %v69, 0
  %v72 = vsub.s32 0, %v69
  %v73 = vsel %vm71, %v72, %v69
  %v74 = vshrl.u32 %v73, 4
  %v75 = vand.u32 %v73, 15
  %v76 = vsub.s32 0, %v75
  %v77 = vsel %vm71, %v76, %v75
  %vm78 = vcmp.lt.s32.totalorder %v70, 0
  %v79 = vsub.s32 0, %v70
  %v80 = vsel %vm78, %v79, %v70
  %v81 = vshrl.u32 %v80, 4
  %v82 = vand.u32 %v80, 15
  %v83 = vsub.s32 0, %v82
  %v84 = vsel %vm78, %v83, %v82
  %vm85 = vcmp.ne.s32.totalorder %v77, 0
  %vm86 = vcmp.ne.s32.totalorder %v84, 0
  %vm87 = vcmp.lt.s32.totalorder %v77, 0
  %vm88 = vcmp.lt.s32.totalorder %v84, 0
  %vm89 = vmand %vm87, %vm85
  %vm90 = vmand %vm88, %vm86
  %v91 = vadd.s32 %v77, 16
  %v92 = vadd.s32 %v84, 16
  %v93 = vsel %vm89, %v91, %v77
  %v94 = vsel %vm90, %v92, %v84
  %vm95 = vcmp.ge.s32.totalorder %v93, 1
  %vm96 = vcmp.ge.s32.totalorder %v94, 1
  %vm97 = vcmp.le.s32.totalorder %v93, 14
  %vm98 = vcmp.le.s32.totalorder %v94, 14
  %101 = vrot.lane.b32.xlu0 %v64, 17
  %v102 = vpop.permute.xlu0 %101
  %103 = vrot.lane.b32.xlu0 %v65, 17
  %v104 = vpop.permute.xlu0 %103
  %vm105 = vcmask 138240
  %v106 = vsel %vm105, %v102, %v104
  %vm108 = vcmask 138240
  %v111 = vsel %vm108, 0, %v102
  %v114 = vsel %vm108, %v104, 0
  %v116 = vsel %vm95, 1, 0
  %v117 = vsel %vm96, 1, 0
  %vm118 = vcmp.eq.s32.totalorder %v116, 1
  %vm119 = vcmp.eq.s32.totalorder %v117, 1
  %vm120 = vmpackc.low %vm119, %vm118
  %v121 = vsel %vm120, 65537, 0
  %v122 = vlaneseq
  %v123 = vshrl.u32 %v122, 7
  %v124 = vsub.s32 0, %v123
  %v125 = vrot.slane %v121, %v124
  %v126 = vlaneseq
  %v127 = vshrl.u32 %v126, 7
  %v128 = vsub.s32 4, %v127
  %v129 = vrot.slane %v121, %v128
  %vm130 = vcmp.ne.s16.totalorder %v125, 0
  %vm131 = vcmp.ne.s16.totalorder %v129, 0
  %v132 = vsel %vm130, %v111, 0
  %v133 = vsel %vm131, %v106, 0
  %v134 = vsel %vm97, 1, 0
  %v135 = vsel %vm98, 1, 0
  %vm136 = vcmp.eq.s32.totalorder %v134, 1
  %vm137 = vcmp.eq.s32.totalorder %v135, 1
  %vm138 = vmpackc.low %vm137, %vm136
  %v139 = vsel %vm138, 65537, 0
  %v140 = vlaneseq
  %v141 = vshrl.u32 %v140, 7
  %v142 = vsub.s32 0, %v141
  %v143 = vrot.slane %v139, %v142
  %v144 = vlaneseq
  %v145 = vshrl.u32 %v144, 7
  %v146 = vsub.s32 4, %v145
  %v147 = vrot.slane %v139, %v146
  %148 = vrot.lane.b32.xlu0 %v143, 2
  %v149 = vpop.permute.xlu0 %148
  %150 = vrot.lane.b32.xlu0 %v147, 2
  %v151 = vpop.permute.xlu0 %150
  %vm152 = vcmask 15360
  %v153 = vsel %vm152, %v149, %v151
  %vm154 = vcmp.ne.s16.totalorder %v149, 0
  %vm155 = vcmp.ne.s16.totalorder %v153, 0
  %vm156 = vcmp.ne.s16.totalorder %v151, 0
  %v157 = vsel %vm154, %v111, 0
  %v158 = vsel %vm155, %v106, 0
  %v159 = vsel %vm156, %v114, 0
  %160 = vrot.lane.b32.xlu0 %v125, 16
  %v161 = vpop.permute.xlu0 %160
  %162 = vrot.lane.b32.xlu0 %v129, 16
  %v163 = vpop.permute.xlu0 %162
  %vm164 = vcmask 130048
  %v165 = vsel %vm164, %v161, %v163
  %vm166 = vcmp.ne.s16.totalorder %v161, 0
  %vm167 = vcmp.ne.s16.totalorder %v165, 0
  %vm168 = vcmp.ne.s16.totalorder %v163, 0
  %v169 = vsel %vm166, %v111, 0
  %v170 = vsel %vm167, %v106, 0
  %v171 = vsel %vm168, %v114, 0
  %172 = vrot.lane.b32.xlu0 %v143, 18
  %v173 = vpop.permute.xlu0 %172
  %174 = vrot.lane.b32.xlu0 %v147, 18
  %v175 = vpop.permute.xlu0 %174
  %vm176 = vcmask 146432
  %v177 = vsel %vm176, %v173, %v175
  %vm178 = vcmp.ne.s16.totalorder %v173, 0
  %vm179 = vcmp.ne.s16.totalorder %v177, 0
  %vm180 = vcmp.ne.s16.totalorder %v175, 0
  %v181 = vsel %vm178, %v111, 0
  %v182 = vsel %vm179, %v106, 0
  %v183 = vsel %vm180, %v114, 0
  %184 = vrot.lane.b32.xlu0 %v125, 32
  %v185 = vpop.permute.xlu0 %184
  %186 = vrot.lane.b32.xlu0 %v129, 32
  %v187 = vpop.permute.xlu0 %186
  %vm188 = vcmask 261120
  %v189 = vsel %vm188, %v185, %v187
  %vm190 = vcmp.ne.s16.totalorder %v185, 0
  %vm191 = vcmp.ne.s16.totalorder %v189, 0
  %vm192 = vcmp.ne.s16.totalorder %v187, 0
  %v193 = vsel %vm190, %v111, 0
  %v194 = vsel %vm191, %v106, 0
  %v195 = vsel %vm192, %v114, 0
  %196 = vrot.lane.b32.xlu0 %v143, 34
  %v197 = vpop.permute.xlu0 %196
  %198 = vrot.lane.b32.xlu0 %v147, 34
  %v199 = vpop.permute.xlu0 %198
  %vm200 = vcmask 277504
  %v201 = vsel %vm200, %v197, %v199
  %vm202 = vcmp.ne.s16.totalorder %v197, 0
  %vm203 = vcmp.ne.s16.totalorder %v201, 0
  %vm204 = vcmp.ne.s16.totalorder %v199, 0
  %v205 = vsel %vm202, %v111, 0
  %v206 = vsel %vm203, %v106, 0
  %v207 = vsel %vm204, %v114, 0
  %v210 = vrot.slane %v111, 6
  %v211 = vrot.slane %v106, 6
  %v212 = vrot.slane %v114, 6
  %213 = vrot.lane.b32.xlu0 %v210, 127
  %v214 = vpop.permute.xlu0 %213
  %215 = vrot.lane.b32.xlu0 %v211, 127
  %v216 = vpop.permute.xlu0 %215
  %217 = vrot.lane.b32.xlu0 %v212, 127
  %v218 = vpop.permute.xlu0 %217
  %vm219 = vcmask 1039360
  %v220 = vsel %vm219, %v214, %v216
  %v221 = vsel %vm219, %v216, %v218
  %v225 = vrot.slane %v157, 4
  %v226 = vrot.slane %v158, 4
  %v227 = vrot.slane %v159, 4
  %228 = vrot.lane.b32.xlu0 %v225, 126
  %v229 = vpop.permute.xlu0 %228
  %230 = vrot.lane.b32.xlu0 %v226, 126
  %v231 = vpop.permute.xlu0 %230
  %232 = vrot.lane.b32.xlu0 %v227, 126
  %v233 = vpop.permute.xlu0 %232
  %vm234 = vcmask 1031168
  %v235 = vsel %vm234, %v229, %v231
  %v236 = vsel %vm234, %v231, %v233
  %v240 = vrot.slane %v169, 2
  %v241 = vrot.slane %v170, 2
  %v242 = vrot.slane %v171, 2
  %243 = vrot.lane.b32.xlu0 %v240, 112
  %v244 = vpop.permute.xlu0 %243
  %245 = vrot.lane.b32.xlu0 %v241, 112
  %v246 = vpop.permute.xlu0 %245
  %247 = vrot.lane.b32.xlu0 %v242, 112
  %v248 = vpop.permute.xlu0 %247
  %vm249 = vcmask 916480
  %v250 = vsel %vm249, %v244, %v246
  %v251 = vsel %vm249, %v246, %v248
  %252 = vrot.lane.b32.xlu0 %v111, 111
  %v253 = vpop.permute.xlu0 %252
  %254 = vrot.lane.b32.xlu0 %v106, 111
  %v255 = vpop.permute.xlu0 %254
  %256 = vrot.lane.b32.xlu0 %v114, 111
  %v257 = vpop.permute.xlu0 %256
  %vm258 = vcmask 908288
  %v259 = vsel %vm258, %v253, %v255
  %v260 = vsel %vm258, %v255, %v257
  %v264 = vrot.slane %v181, 6
  %v265 = vrot.slane %v182, 6
  %v266 = vrot.slane %v183, 6
  %267 = vrot.lane.b32.xlu0 %v264, 110
  %v268 = vpop.permute.xlu0 %267
  %269 = vrot.lane.b32.xlu0 %v265, 110
  %v270 = vpop.permute.xlu0 %269
  %271 = vrot.lane.b32.xlu0 %v266, 110
  %v272 = vpop.permute.xlu0 %271
  %vm273 = vcmask 900096
  %v274 = vsel %vm273, %v268, %v270
  %v275 = vsel %vm273, %v270, %v272
  %v279 = vrot.slane %v193, 4
  %v280 = vrot.slane %v194, 4
  %v281 = vrot.slane %v195, 4
  %282 = vrot.lane.b32.xlu0 %v279, 96
  %v283 = vpop.permute.xlu0 %282
  %284 = vrot.lane.b32.xlu0 %v280, 96
  %v285 = vpop.permute.xlu0 %284
  %286 = vrot.lane.b32.xlu0 %v281, 96
  %v287 = vpop.permute.xlu0 %286
  %vm288 = vcmask 785408
  %v289 = vsel %vm288, %v283, %v285
  %v290 = vsel %vm288, %v285, %v287
  %v291 = vrot.slane %v111, 2
  %v292 = vrot.slane %v106, 2
  %v293 = vrot.slane %v114, 2
  %294 = vrot.lane.b32.xlu0 %v291, 95
  %v295 = vpop.permute.xlu0 %294
  %296 = vrot.lane.b32.xlu0 %v292, 95
  %v297 = vpop.permute.xlu0 %296
  %298 = vrot.lane.b32.xlu0 %v293, 95
  %v299 = vpop.permute.xlu0 %298
  %vm300 = vcmask 777216
  %v301 = vsel %vm300, %v295, %v297
  %v302 = vsel %vm300, %v297, %v299
  %306 = vrot.lane.b32.xlu0 %v205, 94
  %v307 = vpop.permute.xlu0 %306
  %308 = vrot.lane.b32.xlu0 %v206, 94
  %v309 = vpop.permute.xlu0 %308
  %310 = vrot.lane.b32.xlu0 %v207, 94
  %v311 = vpop.permute.xlu0 %310
  %vm312 = vcmask 769024
  %v313 = vsel %vm312, %v307, %v309
  %v314 = vsel %vm312, %v309, %v311
  %vm315 = vcmask 1041408
  %v318 = vsel %vm315, %v132, %v220
  %v321 = vsel %vm315, %v133, %v221
  %vm322 = vcmask 1043456
  %v324 = vsel %vm322, %v318, %v235
  %v326 = vsel %vm322, %v321, %v236
  %vm327 = vcmask 1045504
  %v329 = vsel %vm327, %v324, %v250
  %v332 = vsel %vm327, %v326, %v251
  %v336 = vsel %vm315, %v259, %v274
  %v339 = vsel %vm315, %v260, %v275
  %v341 = vsel %vm322, %v336, %v289
  %v343 = vsel %vm322, %v339, %v290
  %v345 = vsel %vm327, %v341, %v301
  %v348 = vsel %vm327, %v343, %v302
  %352 = vrot.lane.b32.xlu0 %v66, 17
  %v353 = vpop.permute.xlu0 %352
  %354 = vrot.lane.b32.xlu0 %v67, 17
  %v355 = vpop.permute.xlu0 %354
  %v356 = vsel %vm105, %v353, %v355
  %v359 = vsel %vm108, 0, %v353
  %v362 = vsel %vm108, %v355, 0
  %v364 = vsel %vm130, %v359, 0
  %v365 = vsel %vm131, %v356, 0
  %v366 = vsel %vm154, %v359, 0
  %v367 = vsel %vm155, %v356, 0
  %v368 = vsel %vm156, %v362, 0
  %v369 = vsel %vm166, %v359, 0
  %v370 = vsel %vm167, %v356, 0
  %v371 = vsel %vm168, %v362, 0
  %v372 = vsel %vm178, %v359, 0
  %v373 = vsel %vm179, %v356, 0
  %v374 = vsel %vm180, %v362, 0
  %v375 = vsel %vm190, %v359, 0
  %v376 = vsel %vm191, %v356, 0
  %v377 = vsel %vm192, %v362, 0
  %v378 = vsel %vm202, %v359, 0
  %v379 = vsel %vm203, %v356, 0
  %v380 = vsel %vm204, %v362, 0
  %v383 = vrot.slane %v359, 6
  %v384 = vrot.slane %v356, 6
  %v385 = vrot.slane %v362, 6
  %386 = vrot.lane.b32.xlu0 %v383, 127
  %v387 = vpop.permute.xlu0 %386
  %388 = vrot.lane.b32.xlu0 %v384, 127
  %v389 = vpop.permute.xlu0 %388
  %390 = vrot.lane.b32.xlu0 %v385, 127
  %v391 = vpop.permute.xlu0 %390
  %v392 = vsel %vm219, %v387, %v389
  %v393 = vsel %vm219, %v389, %v391
  %v397 = vrot.slane %v366, 4
  %v398 = vrot.slane %v367, 4
  %v399 = vrot.slane %v368, 4
  %400 = vrot.lane.b32.xlu0 %v397, 126
  %v401 = vpop.permute.xlu0 %400
  %402 = vrot.lane.b32.xlu0 %v398, 126
  %v403 = vpop.permute.xlu0 %402
  %404 = vrot.lane.b32.xlu0 %v399, 126
  %v405 = vpop.permute.xlu0 %404
  %v406 = vsel %vm234, %v401, %v403
  %v407 = vsel %vm234, %v403, %v405
  %v411 = vrot.slane %v369, 2
  %v412 = vrot.slane %v370, 2
  %v413 = vrot.slane %v371, 2
  %414 = vrot.lane.b32.xlu0 %v411, 112
  %v415 = vpop.permute.xlu0 %414
  %416 = vrot.lane.b32.xlu0 %v412, 112
  %v417 = vpop.permute.xlu0 %416
  %418 = vrot.lane.b32.xlu0 %v413, 112
  %v419 = vpop.permute.xlu0 %418
  %v420 = vsel %vm249, %v415, %v417
  %v421 = vsel %vm249, %v417, %v419
  %422 = vrot.lane.b32.xlu0 %v359, 111
  %v423 = vpop.permute.xlu0 %422
  %424 = vrot.lane.b32.xlu0 %v356, 111
  %v425 = vpop.permute.xlu0 %424
  %426 = vrot.lane.b32.xlu0 %v362, 111
  %v427 = vpop.permute.xlu0 %426
  %v428 = vsel %vm258, %v423, %v425
  %v429 = vsel %vm258, %v425, %v427
  %v433 = vrot.slane %v372, 6
  %v434 = vrot.slane %v373, 6
  %v435 = vrot.slane %v374, 6
  %436 = vrot.lane.b32.xlu0 %v433, 110
  %v437 = vpop.permute.xlu0 %436
  %438 = vrot.lane.b32.xlu0 %v434, 110
  %v439 = vpop.permute.xlu0 %438
  %440 = vrot.lane.b32.xlu0 %v435, 110
  %v441 = vpop.permute.xlu0 %440
  %v442 = vsel %vm273, %v437, %v439
  %v443 = vsel %vm273, %v439, %v441
  %v447 = vrot.slane %v375, 4
  %v448 = vrot.slane %v376, 4
  %v449 = vrot.slane %v377, 4
  %450 = vrot.lane.b32.xlu0 %v447, 96
  %v451 = vpop.permute.xlu0 %450
  %452 = vrot.lane.b32.xlu0 %v448, 96
  %v453 = vpop.permute.xlu0 %452
  %454 = vrot.lane.b32.xlu0 %v449, 96
  %v455 = vpop.permute.xlu0 %454
  %v456 = vsel %vm288, %v451, %v453
  %v457 = vsel %vm288, %v453, %v455
  %v458 = vrot.slane %v359, 2
  %v459 = vrot.slane %v356, 2
  %v460 = vrot.slane %v362, 2
  %461 = vrot.lane.b32.xlu0 %v458, 95
  %v462 = vpop.permute.xlu0 %461
  %463 = vrot.lane.b32.xlu0 %v459, 95
  %v464 = vpop.permute.xlu0 %463
  %465 = vrot.lane.b32.xlu0 %v460, 95
  %v466 = vpop.permute.xlu0 %465
  %v467 = vsel %vm300, %v462, %v464
  %v468 = vsel %vm300, %v464, %v466
  %472 = vrot.lane.b32.xlu0 %v378, 94
  %v473 = vpop.permute.xlu0 %472
  %474 = vrot.lane.b32.xlu0 %v379, 94
  %v475 = vpop.permute.xlu0 %474
  %476 = vrot.lane.b32.xlu0 %v380, 94
  %v477 = vpop.permute.xlu0 %476
  %v478 = vsel %vm312, %v473, %v475
  %v479 = vsel %vm312, %v475, %v477
  %v482 = vsel %vm315, %v364, %v392
  %v485 = vsel %vm315, %v365, %v393
  %v487 = vsel %vm322, %v482, %v406
  %v489 = vsel %vm322, %v485, %v407
  %v491 = vsel %vm327, %v487, %v420
  %v494 = vsel %vm327, %v489, %v421
  %v498 = vsel %vm315, %v428, %v442
  %v501 = vsel %vm315, %v429, %v443
  %v503 = vsel %vm322, %v498, %v456
  %v505 = vsel %vm322, %v501, %v457
  %v507 = vsel %vm327, %v503, %v467
  %v510 = vsel %vm327, %v505, %v468
  %v512 = vld [vmem:[%s3] sm:$0x3]
  %vm513 = vcmask 293888
  %v515 = vsel %vm513, %v512, 0
  %v518 = vsel %vm315, %v313, 0
  %v521 = vsel %vm315, %v314, 0
  %v524 = vsel %vm315, %v478, 0
  %v527 = vsel %vm315, %v479, 0
  %529 = vmatprep.subr.bf16.mxu0 %v332
  %530 = vmatpush1.bf16.msra.mxu0 %v329
  %531 = vmatprep.subr.bf16.mxu0 %v348
  %532 = vmatpush1.bf16.msra.mxu0 %v345
  %533 = vmatprep.subr.bf16.mxu0 %v521
  %534 = vmatpush1.bf16.msra.mxu0 %v518
  %535 = vmatprep.subr.bf16.mxu0 0
  %536 = vmatpush1.bf16.msra.mxu0 0
  %537 = vmatprep.subr.bf16.mxu0 0
  %538 = vmatpush1.bf16.msra.mxu0 0
  %539 = vmatprep.subr.bf16.mxu0 0
  %540 = vmatpush1.bf16.msra.mxu0 0
  %541 = vmatprep.subr.bf16.mxu0 0
  %542 = vmatpush1.bf16.msra.mxu0 0
  %543 = vmatprep.subr.bf16.mxu0 0
  %544 = vmatpush1.bf16.msra.mxu0 0
  %545 = vmatprep.subr.bf16.mxu0 0
  %546 = vmatpush1.bf16.msra.mxu0 0
  %547 = vmatprep.subr.bf16.mxu0 0
  %548 = vmatpush1.bf16.msra.mxu0 0
  %549 = vmatprep.subr.bf16.mxu0 0
  %550 = vmatpush1.bf16.msra.mxu0 0
  %551 = vmatprep.subr.bf16.mxu0 0
  %552 = vmatpush1.bf16.msra.mxu0 0
  %553 = vmatprep.subr.bf16.mxu0 0
  %554 = vmatpush1.bf16.msra.mxu0 0
  %555 = vmatprep.subr.bf16.mxu0 0
  %556 = vmatpush1.bf16.msra.mxu0 0
  %557 = vmatprep.subr.bf16.mxu0 0
  %558 = vmatpush1.bf16.msra.mxu0 0
  %559 = vmatprep.subr.bf16.mxu0 0
  %560 = vmatpush1.bf16.msra.mxu0 0
  %561 = vmatprep.mubr.bf16.mxu0 0
  %562 = vmatmul.mubr.bf16.gmra.mrb[0].mxu0 %v515
  %v563 = vpop.f32.mrb[0].mxu0
  %v564 = vadd.f32 0.0, %v563
  %v565 = vpop.f32.mrb[0].mxu0
  %v566 = vadd.f32 0.0, %v565
  %v567 = vpop.f32.mrb[0].mxu0
  %v568 = vpop.f32.mrb[0].mxu0
  %569 = vdwg.mxu0
  %570 = vmatprep.subr.bf16.mxu0 %v494
  %571 = vmatpush1.bf16.msra.mxu0 %v491
  %572 = vmatprep.subr.bf16.mxu0 %v510
  %573 = vmatpush1.bf16.msra.mxu0 %v507
  %574 = vmatprep.subr.bf16.mxu0 %v527
  %575 = vmatpush1.bf16.msra.mxu0 %v524
  %576 = vmatprep.subr.bf16.mxu0 0
  %577 = vmatpush1.bf16.msra.mxu0 0
  %578 = vmatprep.subr.bf16.mxu0 0
  %579 = vmatpush1.bf16.msra.mxu0 0
  %580 = vmatprep.subr.bf16.mxu0 0
  %581 = vmatpush1.bf16.msra.mxu0 0
  %582 = vmatprep.subr.bf16.mxu0 0
  %583 = vmatpush1.bf16.msra.mxu0 0
  %584 = vmatprep.subr.bf16.mxu0 0
  %585 = vmatpush1.bf16.msra.mxu0 0
  %586 = vmatprep.subr.bf16.mxu0 0
  %587 = vmatpush1.bf16.msra.mxu0 0
  %588 = vmatprep.subr.bf16.mxu0 0
  %589 = vmatpush1.bf16.msra.mxu0 0
  %590 = vmatprep.subr.bf16.mxu0 0
  %591 = vmatpush1.bf16.msra.mxu0 0
  %592 = vmatprep.subr.bf16.mxu0 0
  %593 = vmatpush1.bf16.msra.mxu0 0
  %594 = vmatprep.subr.bf16.mxu0 0
  %595 = vmatpush1.bf16.msra.mxu0 0
  %596 = vmatprep.subr.bf16.mxu0 0
  %597 = vmatpush1.bf16.msra.mxu0 0
  %598 = vmatprep.subr.bf16.mxu0 0
  %599 = vmatpush1.bf16.msra.mxu0 0
  %600 = vmatprep.subr.bf16.mxu0 0
  %601 = vmatpush1.bf16.msra.mxu0 0
  %602 = vmatprep.mubr.bf16.mxu0 0
  %603 = vmatmul.mubr.bf16.gmra.mrb[0].mxu0 %v515
  %v604 = vpop.f32.mrb[0].mxu0
  %v605 = vadd.f32 0.0, %v604
  %v606 = vpop.f32.mrb[0].mxu0
  %v607 = vadd.f32 0.0, %v606
  %v608 = vpop.f32.mrb[0].mxu0
  %v609 = vpop.f32.mrb[0].mxu0
  %610 = vdwg.mxu0
  %v611 = vpack.c.bf16 %v564, %v564
  %v612 = vpack.c.bf16 %v566, %v566
  %v615 = vcombine.low %v611, %v612
  %v617 = vunpack.c.l.s4 1983009808
  %v618 = vunpack.c.0.s8 %v617
  %v619 = vlaneseq
  %v620 = vshrl.u32 %v619, 7
  %v621 = vsub.s32 %v618, %v620
  %v622 = vrot.slane %v615, %v621
  %624 = vst [vmem:[%s4] sm:$0xf] %v622
  %v625 = vpack.c.bf16 %v605, %v605
  %v626 = vpack.c.bf16 %v607, %v607
  %v629 = vcombine.low %v625, %v626
  %v631 = vunpack.c.l.s4 1983009808
  %v632 = vunpack.c.0.s8 %v631
  %v633 = vlaneseq
  %v634 = vshrl.u32 %v633, 7
  %v635 = vsub.s32 %v632, %v634
  %v636 = vrot.slane %v629, %v635
  %s638 = scalar_lea.vmem %s4, 4
  %639 = vst [vmem:[%s638] sm:$0xf] %v636
  %v640 = vsel %vm322, %v564, 0.0
  %v641 = vsel %vm322, %v566, 0.0
  %v642 = vadd.f32 %v640, %v641
  %v643 = vsel %vm322, %v605, 0.0
  %v644 = vadd.f32 %v642, %v643
  %v645 = vsel %vm322, %v607, 0.0
  %v646 = vadd.f32 %v644, %v645
  %647 = vadd.xlane.f32.xlu0 %v646
  %v648 = vpop.xlane.xlu0 %647
  %v649 = vmul.f32 %v564, %v564
  %v650 = vmul.f32 %v566, %v566
  %v651 = vmul.f32 %v605, %v605
  %v652 = vmul.f32 %v607, %v607
  %v653 = vsel %vm322, %v649, 0.0
  %v654 = vsel %vm322, %v650, 0.0
  %v655 = vadd.f32 %v653, %v654
  %v656 = vsel %vm322, %v651, 0.0
  %v657 = vadd.f32 %v655, %v656
  %v658 = vsel %vm322, %v652, 0.0
  %v659 = vadd.f32 %v657, %v658
  %660 = vadd.xlane.f32.xlu0 %v659
  %v661 = vpop.xlane.xlu0 %660
  %vm662 = vcmask 7168
  %v663 = vsel %vm662, %v648, %v661
  %vm664 = vcmask 11264
  %665 = vst.msk [vmem:[%s5] sm:$0xf] %vm664, %v663
  // Predicated region
  $region18: #{basic_block_forward.4} parent=0 // pred_check
    _
  $region19: #{basic_block_forward.4} parent=0 // pred_check_branch
    %667 = sbr.rel (0) target = $region21
  $region20: #{basic_block_forward.4} parent=0 // pred_region
    _
  $region21: #{basic_block_forward.4} parent=0 // pred_fallthru
    _
  // Predicated region
  $region22: #{basic_block_forward.4} parent=0 // pred_check
    _
  $region23: #{basic_block_forward.4} parent=0 // pred_check_branch
    %669 = sbr.rel (0) target = $region25
  $region24: #{basic_block_forward.4} parent=0 // pred_region
    _
  $region25: #{basic_block_forward.4} parent=0 // pred_fallthru
    _
  // Predicated region
  $region26: #{basic_block_forward.4} parent=0 // pred_check
    _
  $region27: #{basic_block_forward.4} parent=0 // pred_check_branch
    %671 = sbr.rel (0) target = $region29
  $region28: #{basic_block_forward.4} parent=0 // pred_region
    _
  $region29: #{basic_block_forward.4} parent=0 // pred_fallthru
    _
  // Predicated region
  $region30: #{basic_block_forward.4} parent=0 // pred_check
    _
  $region31: #{basic_block_forward.4} parent=0 // pred_check_branch
    %673 = sbr.rel (0) target = $region33
  $region32: #{basic_block_forward.4} parent=0 // pred_region
    _
  $region33: #{basic_block_forward.4} parent=0 // pred_fallthru
    _

</llo_original>
